<compile_context>
chip_gen: v7x
topology: tpu7x:2x2x1
jax: 0.10.0
libtpu: 0.0.40
codegen_flags: <defaults>
</compile_context>

<pallas_src>
import functools

import jax
import jax.numpy as jnp
from jax.experimental import pallas as pl
from jax.experimental.pallas import tpu as pltpu

EPS = 1e-5


# ----------------------------------------------------------------------------
# Fused kernel. One grid step == one image.
#   p1_ref : (1, 4*Cin, M)  2x2/s2 im2col of x, rows ordered (kh, kw, cin),
#                           columns = flattened output positions (lane axis).
#   aux_ref: (3, M)         [flat top-left index, left-edge mask, right-edge mask]
#   w*_ref : scale-folded weights, b*_ref: BN shifts (C, 1)
#   out_ref: (1, Cout, M) f32, idx_ref: (1, Cin, M) int32
#   pad_ref: (Cint, M + 2*Wo + 2) f32 scratch (conv1 output, h-padded)
# ----------------------------------------------------------------------------
def _fused_dsbneck_kernel(p1_ref, aux_ref, w1_ref, b1_ref, w2_ref, b2_ref,
                          w3_ref, b3_ref, out_ref, idx_ref, pad_ref,
                          *, c_in, c_int, c_out, Wo, Wd):
    f32 = jnp.float32
    cdt = p1_ref.dtype                    # streaming/compute dtype (bf16 or f32)
    M = p1_ref.shape[2]                   # Ho * Wo

    p1 = p1_ref[0]                        # (4*c_in, M)

    # ---- ext conv1: 2x2 stride-2 conv + folded BN + ReLU --------------------
    h1 = jnp.dot(w1_ref[...], p1, preferred_element_type=f32)      # (c_int, M)
    h1 = jnp.maximum(h1 + b1_ref[...], 0.0)

    # Stash h1 in a lane-padded scratch: the Wo+1 zero columns on either side
    # realise conv2's zero padding in the image-row direction.  Borders are
    # re-zeroed every step so grid steps stay independent (core-parallel safe);
    # the interior is fully overwritten below.
    pad_ref[:, 0:Wo + 1] = jnp.zeros((c_int, Wo + 1), f32)
    pad_ref[:, Wo + 1 + M:] = jnp.zeros((c_int, Wo + 1), f32)
    pad_ref[:, Wo + 1:Wo + 1 + M] = h1

    mask_l = aux_ref[1:2, :]              # (1, M): 1.0 where wo >= 1
    mask_r = aux_ref[2:3, :]              # (1, M): 1.0 where wo <= Wo-2

    # ---- ext conv2: 3x3/s1/p1 conv as 9 shifted matmuls + BN + ReLU ---------
    acc = jnp.zeros((c_int, M), f32)
    for kh in range(3):
        for kw in range(3):
            dh, dw = kh - 1, kw - 1
            start = (Wo + 1) + dh * Wo + dw
            tap = pad_ref[:, start:start + M]                      # (c_int, M)
            if dw == -1:                  # kill wrap-around at the left edge
                tap = tap * mask_l
            elif dw == 1:                 # kill wrap-around at the right edge
                tap = tap * mask_r
            acc = acc + jnp.dot(w2_ref[kh * 3 + kw], tap.astype(cdt),
                                preferred_element_type=f32)
    h2 = jnp.maximum(acc + b2_ref[...], 0.0)                       # (c_int, M)

    # ---- ext conv3: 1x1 conv + folded BN + ReLU; Dropout2d(p=0) = identity --
    ext = jnp.dot(w3_ref[...], h2.astype(cdt), preferred_element_type=f32)
    ext = jnp.maximum(ext + b3_ref[...], 0.0)                      # (c_out, M)

    # ---- main branch: 2x2 stride-2 max-pool + argmax (flat plane indices) ---
    v0 = p1[0 * c_in:1 * c_in, :].astype(f32)
    v1 = p1[1 * c_in:2 * c_in, :].astype(f32)
    v2 = p1[2 * c_in:3 * c_in, :].astype(f32)
    v3 = p1[3 * c_in:4 * c_in, :].astype(f32)
    mx = jnp.maximum(jnp.maximum(v0, v1), jnp.maximum(v2, v3))
    # Offset of the winner inside the (H, W) input plane; windows scanned in
    # row-major (kh, kw) order, first occurrence wins (matches nn.MaxPool2d for
    # non-NaN inputs).
    offs = jnp.where(v0 == mx, 0.0,
           jnp.where(v1 == mx, 1.0,
           jnp.where(v2 == mx, float(Wd), float(Wd + 1))))
    base = aux_ref[0:1, :]                # (1, M): 2*ho*Wd + 2*wo (exact in f32)
    idx_ref[0] = (base + offs).astype(jnp.int32)                   # (c_in, M)

    # ---- merge: channel-pad main branch, residual add, final ReLU -----------
    # Two dense sub-stores instead of concatenating a zeros block.
    out_ref[0, :c_in, :] = jnp.maximum(ext[:c_in, :] + mx, 0.0)
    if c_out > c_in:
        out_ref[0, c_in:, :] = jnp.maximum(ext[c_in:, :], 0.0)


# ----------------------------------------------------------------------------
# Wrapper (NCHW in / NCHW out, like the PyTorch module).
# ----------------------------------------------------------------------------
def downsampling_bottleneck(x_nchw, params, *, compute_dtype=jnp.bfloat16):
    N, Cin, H, Wd = x_nchw.shape
    assert H % 2 == 0 and Wd % 2 == 0, "spatial dims must be even"
    Ho, Wo = H // 2, Wd // 2
    M = Ho * Wo
    Cint = params["w1k"].shape[0]
    Cout = params["w3k"].shape[0]

    # 2x2/s2 im2col of x, channels-on-rows / output-positions-on-lanes.  Pure
    # relayout (no duplication); optionally streamed as bf16 to halve HBM bytes.
    x6 = x_nchw.reshape(N, Cin, Ho, 2, Wo, 2)
    p1t = jnp.transpose(x6, (0, 3, 5, 1, 2, 4)).reshape(N, 4 * Cin, M)
    p1t = p1t.astype(compute_dtype)

    # Tiny lane-dense per-position constants, fetched once and resident across
    # the batch grid (constant index_map => no per-step refetch).
    m = jnp.arange(M, dtype=jnp.int32)
    ho, wo = m // Wo, m % Wo
    aux = jnp.stack([(2 * ho * Wd + 2 * wo).astype(jnp.float32),
                     (wo >= 1).astype(jnp.float32),
                     (wo <= Wo - 2).astype(jnp.float32)], axis=0)   # (3, M)

    w1 = params["w1k"].astype(compute_dtype)        # (Cint, 4*Cin)
    w2 = params["w2k"].astype(compute_dtype)        # (9, Cint, Cint)
    w3 = params["w3k"].astype(compute_dtype)        # (Cout, Cint)
    b1, b2, b3 = params["b1k"], params["b2k"], params["b3k"]        # f32 (C, 1)

    kernel = functools.partial(_fused_dsbneck_kernel, c_in=Cin, c_int=Cint,
                               c_out=Cout, Wo=Wo, Wd=Wd)

    def const_spec(shape):
        return pl.BlockSpec(shape, lambda n: (0,) * len(shape))

    itemsize = jnp.dtype(compute_dtype).itemsize
    blk_in = M * 4 * Cin * itemsize + 3 * M * 4
    blk_out = M * (Cout + Cin) * 4
    scratch_bytes = ((Cint + 7) // 8) * 8 * (M + 2 * Wo + 2) * 4
    tmp_bytes = (3 * Cout + 12 * Cin + 8 * max(Cint, 8)) * M * 4
    vmem_limit = int(min(max(2 * (blk_in + blk_out) + scratch_bytes + tmp_bytes
                             + (4 << 20), 32 << 20), 64 << 20))
    flops = 2 * N * M * (4 * Cin * Cint + 9 * Cint * Cint + Cint * Cout)
    bytes_accessed = int(N * (M * 4 * Cin * itemsize + blk_out) + 3 * M * 4
                         + (w1.size + w2.size + w3.size) * itemsize
                         + (b1.size + b2.size + b3.size) * 4)

    out, idx = pl.pallas_call(
        kernel,
        grid=(N,),
        in_specs=[
            pl.BlockSpec((1, 4 * Cin, M), lambda n: (n, 0, 0)),   # patches
            const_spec((3, M)),                                    # aux
            const_spec((Cint, 4 * Cin)), const_spec((Cint, 1)),    # conv1
            const_spec((9, Cint, Cint)), const_spec((Cint, 1)),    # conv2
            const_spec((Cout, Cint)), const_spec((Cout, 1)),       # conv3
        ],
        out_specs=(pl.BlockSpec((1, Cout, M), lambda n: (n, 0, 0)),
                   pl.BlockSpec((1, Cin, M), lambda n: (n, 0, 0))),
        out_shape=(jax.ShapeDtypeStruct((N, Cout, M), jnp.float32),
                   jax.ShapeDtypeStruct((N, Cin, M), jnp.int32)),
        scratch_shapes=[pltpu.VMEM((Cint, M + 2 * Wo + 2), jnp.float32)],
        compiler_params=pltpu.CompilerParams(
            dimension_semantics=("parallel",),        # v7x megacore batch split
            vmem_limit_bytes=vmem_limit),
        cost_estimate=pl.CostEstimate(flops=flops, transcendentals=0,
                                      bytes_accessed=bytes_accessed),
    )(p1t, aux, w1, b1, w2, b2, w3, b3)

    # Kernel already emits NCHW-ordered data: only free reshapes remain.
    out = out.reshape(N, Cout, Ho, Wo)
    max_indices = idx.reshape(N, Cin, Ho, Wo)
    return out, max_indices


# ----------------------------------------------------------------------------
# Parameter construction (deterministic, synthetic; eval-mode BatchNorm).
# ----------------------------------------------------------------------------
def make_params(in_channels, out_channels, internal_ratio=4, key=None):
    cint = in_channels // internal_ratio
    k1, k2, k3 = jax.random.split(key, 3)

    w1_t = 0.3 * jax.random.normal(k1, (cint, in_channels, 2, 2), jnp.float32)
    w2_t = 0.3 * jax.random.normal(k2, (cint, cint, 3, 3), jnp.float32)
    w3_t = 0.3 * jax.random.normal(k3, (out_channels, cint, 1, 1), jnp.float32)

    def bn(c):
        gamma = 1.0 + 0.05 * jnp.arange(c, dtype=jnp.float32)
        beta = 0.01 * jnp.arange(c, dtype=jnp.float32)
        scale = gamma / jnp.sqrt(1.0 + EPS)   # running_mean=0, running_var=1
        shift = beta                          # beta - mean * scale
        return gamma, beta, scale, shift

    g1, b1, s1, sh1 = bn(cint)
    g2, b2, s2, sh2 = bn(cint)
    g3, b3, s3, sh3 = bn(out_channels)

    # Kernel-layout weights with the BN scale folded into the output channels.
    w1k = jnp.transpose(w1_t, (0, 2, 3, 1)).reshape(cint, 4 * in_channels)
    w1k = w1k * s1[:, None]                                       # (Cint, 4Cin)
    w2k = jnp.stack([w2_t[:, :, kh, kw] * s2[:, None]
                     for kh in range(3) for kw in range(3)], axis=0)
    w3k = w3_t.reshape(out_channels, cint) * s3[:, None]          # (Cout, Cint)

    return {
        # torch-layout weights / BN params (for the pure-JAX reference)
        "w1_t": w1_t, "w2_t": w2_t, "w3_t": w3_t,
        "g1": g1, "b1": b1, "g2": g2, "b2": b2, "g3": g3, "b3": b3,
        # kernel-layout, scale-folded
        "w1k": w1k, "w2k": w2k, "w3k": w3k,
        "b1k": sh1.reshape(cint, 1), "b2k": sh2.reshape(cint, 1),
        "b3k": sh3.reshape(out_channels, 1),
    }


# ----------------------------------------------------------------------------
# Pure-JAX references (correctness checks)
# ----------------------------------------------------------------------------
def reference_forward(x, p):
    def bn(y, gamma, beta):
        scale = gamma / jnp.sqrt(1.0 + EPS)
        return y * scale[None, :, None, None] + beta[None, :, None, None]

    def conv(y, w, stride, pad):
        return jax.lax.conv_general_dilated(
            y, w, (stride, stride), pad,
            dimension_numbers=("NCHW", "OIHW", "NCHW"))

    relu = lambda t: jnp.maximum(t, 0.0)
    main = jax.lax.reduce_window(x, -jnp.inf, jax.lax.max,
                                 (1, 1, 2, 2), (1, 1, 2, 2), "VALID")
    ext = relu(bn(conv(x, p["w1_t"], 2, "VALID"), p["g1"], p["b1"]))
    ext = relu(bn(conv(ext, p["w2_t"], 1, [(1, 1), (1, 1)]), p["g2"], p["b2"]))
    ext = relu(bn(conv(ext, p["w3_t"], 1, "VALID"), p["g3"], p["b3"]))
    pad_c = ext.shape[1] - main.shape[1]
    main = jnp.pad(main, ((0, 0), (0, pad_c), (0, 0), (0, 0)))
    return relu(main + ext)


def reference_indices(x):
    N, C, H, W = x.shape
    Ho, Wo = H // 2, W // 2
    xw = x.reshape(N, C, Ho, 2, Wo, 2)
    xw = jnp.transpose(xw, (0, 1, 2, 4, 3, 5)).reshape(N, C, Ho, Wo, 4)
    arg = jnp.argmax(xw, axis=-1).astype(jnp.int32)
    ii = jnp.arange(Ho, dtype=jnp.int32).reshape(1, 1, Ho, 1)
    jj = jnp.arange(Wo, dtype=jnp.int32).reshape(1, 1, 1, Wo)
    return (2 * ii + arg // 2) * W + 2 * jj + arg % 2


if __name__ == "__main__":
    key = jax.random.PRNGKey(0)
    k_x, k_p = jax.random.split(key)

    N, Cin, H, W = 2, 8, 16, 16
    Cout = 16
    x = jax.random.normal(k_x, (N, Cin, H, W), jnp.float32)
    params = make_params(Cin, Cout, internal_ratio=4, key=k_p)

    ref_out = reference_forward(x, params)
    ref_idx = reference_indices(x)

    # f32 path: strict value + pooling-index check.
    fwd_f32 = jax.jit(functools.partial(downsampling_bottleneck,
                                        compute_dtype=jnp.float32))
    out32, idx32 = fwd_f32(x, params)
    jax.block_until_ready((out32, idx32))
    assert out32.shape == (N, Cout, H // 2, W // 2)
    assert idx32.shape == (N, Cin, H // 2, W // 2)
    assert jnp.allclose(out32, ref_out, atol=1e-4, rtol=1e-4), "f32 mismatch"
    assert jnp.array_equal(idx32, ref_idx), "max-pool indices mismatch"

    # bf16-streaming path (recommended perf configuration): loose check.
    fwd_bf16 = jax.jit(functools.partial(downsampling_bottleneck,
                                         compute_dtype=jnp.bfloat16))
    out16, idx16 = fwd_bf16(x, params)
    jax.block_until_ready((out16, idx16))
    assert out16.shape == (N, Cout, H // 2, W // 2)
    assert jnp.allclose(out16, ref_out, atol=1e-1, rtol=1e-1), "bf16 mismatch"

    print("KERNEL_OK")
</pallas_src>

<mosaic_0001>
module attributes {stable_mosaic.version = 11 : i64} {
  func.func @_fused_dsbneck_kernel(%arg0: i32, %arg1: memref<1x32x64xf32, #tpu.memory_space<vmem>>, %arg2: memref<3x64xf32, #tpu.memory_space<vmem>>, %arg3: memref<2x32xf32, #tpu.memory_space<vmem>>, %arg4: memref<2x1xf32, #tpu.memory_space<vmem>>, %arg5: memref<9x2x2xf32, #tpu.memory_space<vmem>>, %arg6: memref<2x1xf32, #tpu.memory_space<vmem>>, %arg7: memref<16x2xf32, #tpu.memory_space<vmem>>, %arg8: memref<16x1xf32, #tpu.memory_space<vmem>>, %arg9: memref<1x16x64xf32, #tpu.memory_space<vmem>>, %arg10: memref<1x8x64xi32, #tpu.memory_space<vmem>>, %arg11: memref<2x82xf32, #tpu.memory_space<vmem>>) attributes {dimension_semantics = [#tpu.dimension_semantics<parallel>], iteration_bounds = array<i64: 2>, scalar_prefetch = 0 : i64, scratch_operands = 1 : i64, tpu.core_type = #tpu.core_type<tc>, window_params = [{transform_indices = @transform_0, window_bounds = array<i64: 1, 32, 64>}, {pipeline_mode = #tpu.pipeline_mode<synchronous>, transform_indices = @transform_1, window_bounds = array<i64: 3, 64>}, {pipeline_mode = #tpu.pipeline_mode<synchronous>, transform_indices = @transform_2, window_bounds = array<i64: 2, 32>}, {pipeline_mode = #tpu.pipeline_mode<synchronous>, transform_indices = @transform_3, window_bounds = array<i64: 2, 1>}, {pipeline_mode = #tpu.pipeline_mode<synchronous>, transform_indices = @transform_4, window_bounds = array<i64: 9, 2, 2>}, {pipeline_mode = #tpu.pipeline_mode<synchronous>, transform_indices = @transform_5, window_bounds = array<i64: 2, 1>}, {pipeline_mode = #tpu.pipeline_mode<synchronous>, transform_indices = @transform_6, window_bounds = array<i64: 16, 2>}, {pipeline_mode = #tpu.pipeline_mode<synchronous>, transform_indices = @transform_7, window_bounds = array<i64: 16, 1>}, {transform_indices = @transform_8, window_bounds = array<i64: 1, 16, 64>}, {transform_indices = @transform_9, window_bounds = array<i64: 1, 8, 64>}]} {
    %c0 = arith.constant 0 : index
    %c0_0 = arith.constant 0 : index
    %c0_1 = arith.constant 0 : index
    %0 = vector.load %arg1[%c0, %c0_0, %c0_1] : memref<1x32x64xf32, #tpu.memory_space<vmem>>, vector<1x32x64xf32>
    %1 = vector.shape_cast %0 : vector<1x32x64xf32> to vector<32x64xf32>
    %c0_2 = arith.constant 0 : index
    %c0_3 = arith.constant 0 : index
    %2 = vector.load %arg3[%c0_2, %c0_3] : memref<2x32xf32, #tpu.memory_space<vmem>>, vector<2x32xf32>
    %cst = arith.constant dense<0.000000e+00> : vector<2x64xf32>
    %3 = tpu.matmul %2, %1, %cst {dimension_numbers = #tpu.dot_dimension_numbers<[1], [0], [0], [1], [0, 0, 1, 1], [], []>} : vector<2x32xf32>, vector<32x64xf32>, vector<2x64xf32> -> vector<2x64xf32>
    %c0_4 = arith.constant 0 : index
    %c0_5 = arith.constant 0 : index
    %4 = vector.load %arg4[%c0_4, %c0_5] : memref<2x1xf32, #tpu.memory_space<vmem>>, vector<2x1xf32>
    %5 = vector.broadcast %4 : vector<2x1xf32> to vector<2x64xf32>
    %6 = arith.addf %3, %5 : vector<2x64xf32>
    %cst_6 = arith.constant 0.000000e+00 : f32
    %7 = vector.broadcast %cst_6 : f32 to vector<2x64xf32>
    %8 = arith.maximumf %6, %7 : vector<2x64xf32>
    %cst_7 = arith.constant 0.000000e+00 : f32
    %9 = vector.broadcast %cst_7 : f32 to vector<2x9xf32>
    %c0_8 = arith.constant 0 : index
    %c0_9 = arith.constant 0 : index
    %10 = vector.load %arg11[%c0_8, %c0_9] : memref<2x82xf32, #tpu.memory_space<vmem>>, vector<2x9xf32>
    tpu.vector_store %arg11[%c0_8, %c0_9], %9 {strides = array<i32>} : memref<2x82xf32, #tpu.memory_space<vmem>>, vector<2x9xf32>,
    %cst_10 = arith.constant 0.000000e+00 : f32
    %11 = vector.broadcast %cst_10 : f32 to vector<2x9xf32>
    %c0_11 = arith.constant 0 : index
    %c73 = arith.constant 73 : index
    %12 = vector.load %arg11[%c0_11, %c73] : memref<2x82xf32, #tpu.memory_space<vmem>>, vector<2x9xf32>
    tpu.vector_store %arg11[%c0_11, %c73], %11 {strides = array<i32>} : memref<2x82xf32, #tpu.memory_space<vmem>>, vector<2x9xf32>,
    %c0_12 = arith.constant 0 : index
    %c9 = arith.constant 9 : index
    %13 = vector.load %arg11[%c0_12, %c9] : memref<2x82xf32, #tpu.memory_space<vmem>>, vector<2x64xf32>
    tpu.vector_store %arg11[%c0_12, %c9], %8 {strides = array<i32>} : memref<2x82xf32, #tpu.memory_space<vmem>>, vector<2x64xf32>,
    %c1 = arith.constant 1 : index
    %c0_13 = arith.constant 0 : index
    %14 = vector.load %arg2[%c1, %c0_13] : memref<3x64xf32, #tpu.memory_space<vmem>>, vector<1x64xf32>
    %c2 = arith.constant 2 : index
    %c0_14 = arith.constant 0 : index
    %15 = vector.load %arg2[%c2, %c0_14] : memref<3x64xf32, #tpu.memory_space<vmem>>, vector<1x64xf32>
    %cst_15 = arith.constant 0.000000e+00 : f32
    %16 = vector.broadcast %cst_15 : f32 to vector<2x64xf32>
    %c0_16 = arith.constant 0 : index
    %c0_17 = arith.constant 0 : index
    %17 = vector.load %arg11[%c0_16, %c0_17] : memref<2x82xf32, #tpu.memory_space<vmem>>, vector<2x64xf32>
    %18 = vector.broadcast %14 : vector<1x64xf32> to vector<2x64xf32>
    %19 = arith.mulf %17, %18 : vector<2x64xf32>
    %c0_18 = arith.constant 0 : index
    %c0_19 = arith.constant 0 : index
    %c0_20 = arith.constant 0 : index
    %20 = vector.load %arg5[%c0_18, %c0_19, %c0_20] : memref<9x2x2xf32, #tpu.memory_space<vmem>>, vector<1x2x2xf32>
    %21 = vector.shape_cast %20 : vector<1x2x2xf32> to vector<2x2xf32>
    %cst_21 = arith.constant dense<0.000000e+00> : vector<2x64xf32>
    %22 = tpu.matmul %21, %19, %cst_21 {dimension_numbers = #tpu.dot_dimension_numbers<[1], [0], [0], [1], [0, 0, 1, 1], [], []>} : vector<2x2xf32>, vector<2x64xf32>, vector<2x64xf32> -> vector<2x64xf32>
    %23 = arith.addf %16, %22 : vector<2x64xf32>
    %c0_22 = arith.constant 0 : index
    %c1_23 = arith.constant 1 : index
    %24 = vector.load %arg11[%c0_22, %c1_23] : memref<2x82xf32, #tpu.memory_space<vmem>>, vector<2x64xf32>
    %c1_24 = arith.constant 1 : index
    %c0_25 = arith.constant 0 : index
    %c0_26 = arith.constant 0 : index
    %25 = vector.load %arg5[%c1_24, %c0_25, %c0_26] : memref<9x2x2xf32, #tpu.memory_space<vmem>>, vector<1x2x2xf32>
    %26 = vector.shape_cast %25 : vector<1x2x2xf32> to vector<2x2xf32>
    %cst_27 = arith.constant dense<0.000000e+00> : vector<2x64xf32>
    %27 = tpu.matmul %26, %24, %cst_27 {dimension_numbers = #tpu.dot_dimension_numbers<[1], [0], [0], [1], [0, 0, 1, 1], [], []>} : vector<2x2xf32>, vector<2x64xf32>, vector<2x64xf32> -> vector<2x64xf32>
    %28 = arith.addf %23, %27 : vector<2x64xf32>
    %c0_28 = arith.constant 0 : index
    %c2_29 = arith.constant 2 : index
    %29 = vector.load %arg11[%c0_28, %c2_29] : memref<2x82xf32, #tpu.memory_space<vmem>>, vector<2x64xf32>
    %30 = vector.broadcast %15 : vector<1x64xf32> to vector<2x64xf32>
    %31 = arith.mulf %29, %30 : vector<2x64xf32>
    %c2_30 = arith.constant 2 : index
    %c0_31 = arith.constant 0 : index
    %c0_32 = arith.constant 0 : index
    %32 = vector.load %arg5[%c2_30, %c0_31, %c0_32] : memref<9x2x2xf32, #tpu.memory_space<vmem>>, vector<1x2x2xf32>
    %33 = vector.shape_cast %32 : vector<1x2x2xf32> to vector<2x2xf32>
    %cst_33 = arith.constant dense<0.000000e+00> : vector<2x64xf32>
    %34 = tpu.matmul %33, %31, %cst_33 {dimension_numbers = #tpu.dot_dimension_numbers<[1], [0], [0], [1], [0, 0, 1, 1], [], []>} : vector<2x2xf32>, vector<2x64xf32>, vector<2x64xf32> -> vector<2x64xf32>
    %35 = arith.addf %28, %34 : vector<2x64xf32>
    %c0_34 = arith.constant 0 : index
    %c8 = arith.constant 8 : index
    %36 = vector.load %arg11[%c0_34, %c8] : memref<2x82xf32, #tpu.memory_space<vmem>>, vector<2x64xf32>
    %37 = vector.broadcast %14 : vector<1x64xf32> to vector<2x64xf32>
    %38 = arith.mulf %36, %37 : vector<2x64xf32>
    %c3 = arith.constant 3 : index
    %c0_35 = arith.constant 0 : index
    %c0_36 = arith.constant 0 : index
    %39 = vector.load %arg5[%c3, %c0_35, %c0_36] : memref<9x2x2xf32, #tpu.memory_space<vmem>>, vector<1x2x2xf32>
    %40 = vector.shape_cast %39 : vector<1x2x2xf32> to vector<2x2xf32>
    %cst_37 = arith.constant dense<0.000000e+00> : vector<2x64xf32>
    %41 = tpu.matmul %40, %38, %cst_37 {dimension_numbers = #tpu.dot_dimension_numbers<[1], [0], [0], [1], [0, 0, 1, 1], [], []>} : vector<2x2xf32>, vector<2x64xf32>, vector<2x64xf32> -> vector<2x64xf32>
    %42 = arith.addf %35, %41 : vector<2x64xf32>
    %c0_38 = arith.constant 0 : index
    %c9_39 = arith.constant 9 : index
    %43 = vector.load %arg11[%c0_38, %c9_39] : memref<2x82xf32, #tpu.memory_space<vmem>>, vector<2x64xf32>
    %c4 = arith.constant 4 : index
    %c0_40 = arith.constant 0 : index
    %c0_41 = arith.constant 0 : index
    %44 = vector.load %arg5[%c4, %c0_40, %c0_41] : memref<9x2x2xf32, #tpu.memory_space<vmem>>, vector<1x2x2xf32>
    %45 = vector.shape_cast %44 : vector<1x2x2xf32> to vector<2x2xf32>
    %cst_42 = arith.constant dense<0.000000e+00> : vector<2x64xf32>
    %46 = tpu.matmul %45, %43, %cst_42 {dimension_numbers = #tpu.dot_dimension_numbers<[1], [0], [0], [1], [0, 0, 1, 1], [], []>} : vector<2x2xf32>, vector<2x64xf32>, vector<2x64xf32> -> vector<2x64xf32>
    %47 = arith.addf %42, %46 : vector<2x64xf32>
    %c0_43 = arith.constant 0 : index
    %c10 = arith.constant 10 : index
    %48 = vector.load %arg11[%c0_43, %c10] : memref<2x82xf32, #tpu.memory_space<vmem>>, vector<2x64xf32>
    %49 = vector.broadcast %15 : vector<1x64xf32> to vector<2x64xf32>
    %50 = arith.mulf %48, %49 : vector<2x64xf32>
    %c5 = arith.constant 5 : index
    %c0_44 = arith.constant 0 : index
    %c0_45 = arith.constant 0 : index
    %51 = vector.load %arg5[%c5, %c0_44, %c0_45] : memref<9x2x2xf32, #tpu.memory_space<vmem>>, vector<1x2x2xf32>
    %52 = vector.shape_cast %51 : vector<1x2x2xf32> to vector<2x2xf32>
    %cst_46 = arith.constant dense<0.000000e+00> : vector<2x64xf32>
    %53 = tpu.matmul %52, %50, %cst_46 {dimension_numbers = #tpu.dot_dimension_numbers<[1], [0], [0], [1], [0, 0, 1, 1], [], []>} : vector<2x2xf32>, vector<2x64xf32>, vector<2x64xf32> -> vector<2x64xf32>
    %54 = arith.addf %47, %53 : vector<2x64xf32>
    %c0_47 = arith.constant 0 : index
    %c16 = arith.constant 16 : index
    %55 = vector.load %arg11[%c0_47, %c16] : memref<2x82xf32, #tpu.memory_space<vmem>>, vector<2x64xf32>
    %56 = vector.broadcast %14 : vector<1x64xf32> to vector<2x64xf32>
    %57 = arith.mulf %55, %56 : vector<2x64xf32>
    %c6 = arith.constant 6 : index
    %c0_48 = arith.constant 0 : index
    %c0_49 = arith.constant 0 : index
    %58 = vector.load %arg5[%c6, %c0_48, %c0_49] : memref<9x2x2xf32, #tpu.memory_space<vmem>>, vector<1x2x2xf32>
    %59 = vector.shape_cast %58 : vector<1x2x2xf32> to vector<2x2xf32>
    %cst_50 = arith.constant dense<0.000000e+00> : vector<2x64xf32>
    %60 = tpu.matmul %59, %57, %cst_50 {dimension_numbers = #tpu.dot_dimension_numbers<[1], [0], [0], [1], [0, 0, 1, 1], [], []>} : vector<2x2xf32>, vector<2x64xf32>, vector<2x64xf32> -> vector<2x64xf32>
    %61 = arith.addf %54, %60 : vector<2x64xf32>
    %c0_51 = arith.constant 0 : index
    %c17 = arith.constant 17 : index
    %62 = vector.load %arg11[%c0_51, %c17] : memref<2x82xf32, #tpu.memory_space<vmem>>, vector<2x64xf32>
    %c7 = arith.constant 7 : index
    %c0_52 = arith.constant 0 : index
    %c0_53 = arith.constant 0 : index
    %63 = vector.load %arg5[%c7, %c0_52, %c0_53] : memref<9x2x2xf32, #tpu.memory_space<vmem>>, vector<1x2x2xf32>
    %64 = vector.shape_cast %63 : vector<1x2x2xf32> to vector<2x2xf32>
    %cst_54 = arith.constant dense<0.000000e+00> : vector<2x64xf32>
    %65 = tpu.matmul %64, %62, %cst_54 {dimension_numbers = #tpu.dot_dimension_numbers<[1], [0], [0], [1], [0, 0, 1, 1], [], []>} : vector<2x2xf32>, vector<2x64xf32>, vector<2x64xf32> -> vector<2x64xf32>
    %66 = arith.addf %61, %65 : vector<2x64xf32>
    %c0_55 = arith.constant 0 : index
    %c18 = arith.constant 18 : index
    %67 = vector.load %arg11[%c0_55, %c18] : memref<2x82xf32, #tpu.memory_space<vmem>>, vector<2x64xf32>
    %68 = vector.broadcast %15 : vector<1x64xf32> to vector<2x64xf32>
    %69 = arith.mulf %67, %68 : vector<2x64xf32>
    %c8_56 = arith.constant 8 : index
    %c0_57 = arith.constant 0 : index
    %c0_58 = arith.constant 0 : index
    %70 = vector.load %arg5[%c8_56, %c0_57, %c0_58] : memref<9x2x2xf32, #tpu.memory_space<vmem>>, vector<1x2x2xf32>
    %71 = vector.shape_cast %70 : vector<1x2x2xf32> to vector<2x2xf32>
    %cst_59 = arith.constant dense<0.000000e+00> : vector<2x64xf32>
    %72 = tpu.matmul %71, %69, %cst_59 {dimension_numbers = #tpu.dot_dimension_numbers<[1], [0], [0], [1], [0, 0, 1, 1], [], []>} : vector<2x2xf32>, vector<2x64xf32>, vector<2x64xf32> -> vector<2x64xf32>
    %73 = arith.addf %66, %72 : vector<2x64xf32>
    %c0_60 = arith.constant 0 : index
    %c0_61 = arith.constant 0 : index
    %74 = vector.load %arg6[%c0_60, %c0_61] : memref<2x1xf32, #tpu.memory_space<vmem>>, vector<2x1xf32>
    %75 = vector.broadcast %74 : vector<2x1xf32> to vector<2x64xf32>
    %76 = arith.addf %73, %75 : vector<2x64xf32>
    %cst_62 = arith.constant 0.000000e+00 : f32
    %77 = vector.broadcast %cst_62 : f32 to vector<2x64xf32>
    %78 = arith.maximumf %76, %77 : vector<2x64xf32>
    %c0_63 = arith.constant 0 : index
    %c0_64 = arith.constant 0 : index
    %79 = vector.load %arg7[%c0_63, %c0_64] : memref<16x2xf32, #tpu.memory_space<vmem>>, vector<16x2xf32>
    %cst_65 = arith.constant dense<0.000000e+00> : vector<16x64xf32>
    %80 = tpu.matmul %79, %78, %cst_65 {dimension_numbers = #tpu.dot_dimension_numbers<[1], [0], [0], [1], [0, 0, 1, 1], [], []>} : vector<16x2xf32>, vector<2x64xf32>, vector<16x64xf32> -> vector<16x64xf32>
    %c0_66 = arith.constant 0 : index
    %c0_67 = arith.constant 0 : index
    %81 = vector.load %arg8[%c0_66, %c0_67] : memref<16x1xf32, #tpu.memory_space<vmem>>, vector<16x1xf32>
    %82 = vector.broadcast %81 : vector<16x1xf32> to vector<16x64xf32>
    %83 = arith.addf %80, %82 : vector<16x64xf32>
    %cst_68 = arith.constant 0.000000e+00 : f32
    %84 = vector.broadcast %cst_68 : f32 to vector<16x64xf32>
    %85 = arith.maximumf %83, %84 : vector<16x64xf32>
    %86 = vector.extract_strided_slice %1 {offsets = [0, 0], sizes = [8, 64], strides = [1, 1]} : vector<32x64xf32> to vector<8x64xf32>
    %87 = vector.extract_strided_slice %1 {offsets = [8, 0], sizes = [8, 64], strides = [1, 1]} : vector<32x64xf32> to vector<8x64xf32>
    %88 = vector.extract_strided_slice %1 {offsets = [16, 0], sizes = [8, 64], strides = [1, 1]} : vector<32x64xf32> to vector<8x64xf32>
    %89 = vector.extract_strided_slice %1 {offsets = [24, 0], sizes = [8, 64], strides = [1, 1]} : vector<32x64xf32> to vector<8x64xf32>
    %90 = arith.maximumf %86, %87 : vector<8x64xf32>
    %91 = arith.maximumf %88, %89 : vector<8x64xf32>
    %92 = arith.maximumf %90, %91 : vector<8x64xf32>
    %93 = arith.cmpf oeq, %86, %92 : vector<8x64xf32>
    %94 = arith.cmpf oeq, %87, %92 : vector<8x64xf32>
    %95 = arith.cmpf oeq, %88, %92 : vector<8x64xf32>
    %cst_69 = arith.constant 1.600000e+01 : f32
    %cst_70 = arith.constant 1.700000e+01 : f32
    %96 = vector.broadcast %cst_69 : f32 to vector<8x64xf32>
    %97 = vector.broadcast %cst_70 : f32 to vector<8x64xf32>
    %98 = arith.select %95, %96, %97 : vector<8x64xi1>, vector<8x64xf32>
    %cst_71 = arith.constant 1.000000e+00 : f32
    %99 = vector.broadcast %cst_71 : f32 to vector<8x64xf32>
    %100 = arith.select %94, %99, %98 : vector<8x64xi1>, vector<8x64xf32>
    %cst_72 = arith.constant 0.000000e+00 : f32
    %101 = vector.broadcast %cst_72 : f32 to vector<8x64xf32>
    %102 = arith.select %93, %101, %100 : vector<8x64xi1>, vector<8x64xf32>
    %c0_73 = arith.constant 0 : index
    %c0_74 = arith.constant 0 : index
    %103 = vector.load %arg2[%c0_73, %c0_74] : memref<3x64xf32, #tpu.memory_space<vmem>>, vector<1x64xf32>
    %104 = vector.broadcast %103 : vector<1x64xf32> to vector<8x64xf32>
    %105 = arith.addf %104, %102 : vector<8x64xf32>
    %106 = arith.fptosi %105 : vector<8x64xf32> to vector<8x64xi32>
    %c0_75 = arith.constant 0 : index
    %c0_76 = arith.constant 0 : index
    %c0_77 = arith.constant 0 : index
    %107 = vector.load %arg10[%c0_75, %c0_76, %c0_77] : memref<1x8x64xi32, #tpu.memory_space<vmem>>, vector<1x8x64xi32>
    %108 = vector.shape_cast %107 : vector<1x8x64xi32> to vector<8x64xi32>
    %109 = vector.shape_cast %106 : vector<8x64xi32> to vector<1x8x64xi32>
    tpu.vector_store %arg10[%c0_75, %c0_76, %c0_77], %109 {strides = array<i32>} : memref<1x8x64xi32, #tpu.memory_space<vmem>>, vector<1x8x64xi32>,
    %110 = vector.extract_strided_slice %85 {offsets = [0, 0], sizes = [8, 64], strides = [1, 1]} : vector<16x64xf32> to vector<8x64xf32>
    %111 = arith.addf %110, %92 : vector<8x64xf32>
    %cst_78 = arith.constant 0.000000e+00 : f32
    %112 = vector.broadcast %cst_78 : f32 to vector<8x64xf32>
    %113 = arith.maximumf %111, %112 : vector<8x64xf32>
    %c0_79 = arith.constant 0 : index
    %c0_80 = arith.constant 0 : index
    %c0_81 = arith.constant 0 : index
    %114 = vector.load %arg9[%c0_79, %c0_80, %c0_81] : memref<1x16x64xf32, #tpu.memory_space<vmem>>, vector<1x8x64xf32>
    %115 = vector.shape_cast %114 : vector<1x8x64xf32> to vector<8x64xf32>
    %116 = vector.shape_cast %113 : vector<8x64xf32> to vector<1x8x64xf32>
    tpu.vector_store %arg9[%c0_79, %c0_80, %c0_81], %116 {strides = array<i32>} : memref<1x16x64xf32, #tpu.memory_space<vmem>>, vector<1x8x64xf32>,
    %117 = vector.extract_strided_slice %85 {offsets = [8, 0], sizes = [8, 64], strides = [1, 1]} : vector<16x64xf32> to vector<8x64xf32>
    %cst_82 = arith.constant 0.000000e+00 : f32
    %118 = vector.broadcast %cst_82 : f32 to vector<8x64xf32>
    %119 = arith.maximumf %117, %118 : vector<8x64xf32>
    %c0_83 = arith.constant 0 : index
    %c8_84 = arith.constant 8 : index
    %c0_85 = arith.constant 0 : index
    %120 = vector.load %arg9[%c0_83, %c8_84, %c0_85] : memref<1x16x64xf32, #tpu.memory_space<vmem>>, vector<1x8x64xf32>
    %121 = vector.shape_cast %120 : vector<1x8x64xf32> to vector<8x64xf32>
    %122 = vector.shape_cast %119 : vector<8x64xf32> to vector<1x8x64xf32>
    tpu.vector_store %arg9[%c0_83, %c8_84, %c0_85], %122 {strides = array<i32>} : memref<1x16x64xf32, #tpu.memory_space<vmem>>, vector<1x8x64xf32>,
    return
  }
  func.func @transform_0(%arg0: i32) -> (i32, i32, i32) {
    %c0_i32 = arith.constant 0 : i32
    %c0_i32_0 = arith.constant 0 : i32
    %c0_i32_1 = arith.constant 0 : i32
    return %arg0, %c0_i32, %c0_i32_0 : i32, i32, i32
  }
  func.func @transform_1(%arg0: i32) -> (i32, i32) {
    %c0_i32 = arith.constant 0 : i32
    %c0_i32_0 = arith.constant 0 : i32
    %c0_i32_1 = arith.constant 0 : i32
    return %c0_i32, %c0_i32_0 : i32, i32
  }
  func.func @transform_2(%arg0: i32) -> (i32, i32) {
    %c0_i32 = arith.constant 0 : i32
    %c0_i32_0 = arith.constant 0 : i32
    %c0_i32_1 = arith.constant 0 : i32
    return %c0_i32, %c0_i32_0 : i32, i32
  }
  func.func @transform_3(%arg0: i32) -> (i32, i32) {
    %c0_i32 = arith.constant 0 : i32
    %c0_i32_0 = arith.constant 0 : i32
    %c0_i32_1 = arith.constant 0 : i32
    return %c0_i32, %c0_i32_0 : i32, i32
  }
  func.func @transform_4(%arg0: i32) -> (i32, i32, i32) {
    %c0_i32 = arith.constant 0 : i32
    %c0_i32_0 = arith.constant 0 : i32
    %c0_i32_1 = arith.constant 0 : i32
    %c0_i32_2 = arith.constant 0 : i32
    return %c0_i32, %c0_i32_0, %c0_i32_1 : i32, i32, i32
  }
  func.func @transform_5(%arg0: i32) -> (i32, i32) {
    %c0_i32 = arith.constant 0 : i32
    %c0_i32_0 = arith.constant 0 : i32
    %c0_i32_1 = arith.constant 0 : i32
    return %c0_i32, %c0_i32_0 : i32, i32
  }
  func.func @transform_6(%arg0: i32) -> (i32, i32) {
    %c0_i32 = arith.constant 0 : i32
    %c0_i32_0 = arith.constant 0 : i32
    %c0_i32_1 = arith.constant 0 : i32
    return %c0_i32, %c0_i32_0 : i32, i32
  }
  func.func @transform_7(%arg0: i32) -> (i32, i32) {
    %c0_i32 = arith.constant 0 : i32
    %c0_i32_0 = arith.constant 0 : i32
    %c0_i32_1 = arith.constant 0 : i32
    return %c0_i32, %c0_i32_0 : i32, i32
  }
  func.func @transform_8(%arg0: i32) -> (i32, i32, i32) {
    %c0_i32 = arith.constant 0 : i32
    %c0_i32_0 = arith.constant 0 : i32
    %c0_i32_1 = arith.constant 0 : i32
    return %arg0, %c0_i32, %c0_i32_0 : i32, i32, i32
  }
  func.func @transform_9(%arg0: i32) -> (i32, i32, i32) {
    %c0_i32 = arith.constant 0 : i32
    %c0_i32_0 = arith.constant 0 : i32
    %c0_i32_1 = arith.constant 0 : i32
    return %arg0, %c0_i32, %c0_i32_0 : i32, i32, i32
  }
}

</mosaic_0001>

<llo_original>
// kernel: downsampling_bottleneck.1
$region0: #{downsampling_bottleneck.1}
  #allocation0 [shape = 'u32[]', space=smem, size = 0x4, offset = 0x4, fixed_abs, tag = 'smem constant byte address 0x4 - core index']
  #allocation1 [shape = 'u32[144,128]{1,0:T(1,128)}', space=vmem, size = 0x12000, scoped, tag = 'internal scratch']
  #allocation2 [shape = 'f32[2,82]{1,0:T(2,128)}', space=vmem, size = 0x400, scoped, tag = 'scratch operand']
  %s0 = inlined_call_operand.vmem [shape: f32[2,32,64], index: 0, kind: input, shape index: {}]
  %s1 = inlined_call_operand.vmem [shape: f32[3,64], index: 1, kind: input, shape index: {}]
  %s2 = inlined_call_operand.vmem [shape: f32[2,32], index: 2, kind: input, shape index: {}]
  %s3 = inlined_call_operand.vmem [shape: f32[2,1], index: 3, kind: input, shape index: {}]
  %s4 = inlined_call_operand.vmem [shape: f32[9,2,2], index: 4, kind: input, shape index: {}]
  %s5 = inlined_call_operand.vmem [shape: f32[2,1], index: 5, kind: input, shape index: {}]
  %s6 = inlined_call_operand.vmem [shape: f32[16,2], index: 6, kind: input, shape index: {}]
  %s7 = inlined_call_operand.vmem [shape: f32[16,1], index: 7, kind: input, shape index: {}]
  %s8 = inlined_call_operand.vmem [shape: f32[2,16,64], index: 8, kind: output, shape index: {0}]
  %s9 = inlined_call_operand.vmem [shape: s32[2,8,64], index: 9, kind: output, shape index: {1}]
  %10 = xla_tuple %s8, %s9
  %s11 = sld [smem:[#allocation0]]
  $region73: #{downsampling_bottleneck.1} parent=0
    _
  %s13 = ssub.s32 1, %s11
  %s14 = scalar_select 0, %s13, %s11
  loop: start=0, step=1, limit=4
  $region2: #{downsampling_bottleneck.1} parent=0 // loop_pre_header
    _
  $region3: #{downsampling_bottleneck.1} parent=0 // loop_header
    %s16 = sphi 0, %s20
    %p17 = scmp.ge.s32.totalorder %s16, 4
    %s26 = sphi 0, %s28
    %s29 = sphi 0, %s26
    %s30 = sphi 0, %s29
    %s46 = sphi 0, %s30
    %s50 = sphi 0, %s50
    %s52 = sphi 0, %s50
    %s53 = sphi 0, %s52
    %s67 = sphi 0, %s53
    %s71 = sphi 0, %s71
    %s73 = sphi 0, %s71
    %s74 = sphi 0, %s73
    %s88 = sphi 0, %s74
    %s92 = sphi 0, %s92
    %s94 = sphi 0, %s92
    %s95 = sphi 0, %s94
    %s109 = sphi 0, %s95
    %s113 = sphi 0, %s113
    %s115 = sphi 0, %s113
    %s116 = sphi 0, %s115
    %s130 = sphi 0, %s116
    %s134 = sphi 0, %s134
    %s136 = sphi 0, %s134
    %s137 = sphi 0, %s136
    %s151 = sphi 0, %s137
    %s155 = sphi 0, %s155
    %s157 = sphi 0, %s155
    %s158 = sphi 0, %s157
    %s172 = sphi 0, %s158
    %s176 = sphi 0, %s176
    %s178 = sphi 0, %s176
    %s179 = sphi 0, %s178
    %s193 = sphi 0, %s179
    %s199 = sphi 0, %s201
    %s202 = sphi 0, %s199
    %s203 = sphi 0, %s202
    %s219 = sphi 0, %s203
    %s225 = sphi 0, %s227
    %s228 = sphi 0, %s225
    %s229 = sphi 0, %s228
    %s245 = sphi 0, %s229
  $region4: #{downsampling_bottleneck.1} parent=0 // loop_header_branch
    %19 = sbr.rel (%p17) target = $region8
  $region5: #{downsampling_bottleneck.1} parent=0 // loop_body
    %s21 = ssub.s32 %s16, 1
    %s22 = ssub.s32 %s16, 2
    %s23 = sadd.s32 %s16, 1
    %s24 = ssub.s32 %s16, %s23
    %p25 = scmp.eq.s32.totalorder %s24, 0
    %s27 = sadd.s32 %s26, 1
    %s28 = scalar_select %p25, %s26, %s27
    %p31 = pneg %p25
    %p32 = scmp.eq.s32.totalorder %s16, 1
    %p33 = por %p31, %p32
    %p34 = scmp.ne.s32.totalorder %s26, %s29
    %p35 = scmp.eq.s32.totalorder %s16, 0
    %p36 = por %p34, %p35
    %p37 = scmp.ne.s32.totalorder %s26, %s29
    %p38 = scmp.eq.s32.totalorder %s21, 1
    %p39 = por %p37, %p38
    %p40 = scmp.ne.s32.totalorder %s29, %s30
    %p41 = scmp.eq.s32.totalorder %s21, 0
    %p42 = por %p40, %p41
    %p43 = scmp.ne.s32.totalorder %s29, %s30
    %p44 = scmp.eq.s32.totalorder %s22, 1
    %p45 = por %p43, %p44
    %p47 = scmp.ne.s32.totalorder %s30, %s46
    %p48 = scmp.eq.s32.totalorder %s22, 0
    %p49 = por %p47, %p48
    %s51 = sadd.s32 %s50, 1
    %p54 = scmp.eq.s32.totalorder %s16, 1
    %p55 = scmp.ne.s32.totalorder %s50, %s52
    %p56 = scmp.eq.s32.totalorder %s16, 0
    %p57 = por %p55, %p56
    %p58 = scmp.ne.s32.totalorder %s50, %s52
    %p59 = scmp.eq.s32.totalorder %s21, 1
    %p60 = por %p58, %p59
    %p61 = scmp.ne.s32.totalorder %s52, %s53
    %p62 = scmp.eq.s32.totalorder %s21, 0
    %p63 = por %p61, %p62
    %p64 = scmp.ne.s32.totalorder %s52, %s53
    %p65 = scmp.eq.s32.totalorder %s22, 1
    %p66 = por %p64, %p65
    %p68 = scmp.ne.s32.totalorder %s53, %s67
    %p69 = scmp.eq.s32.totalorder %s22, 0
    %p70 = por %p68, %p69
    %s72 = sadd.s32 %s71, 1
    %p75 = scmp.eq.s32.totalorder %s16, 1
    %p76 = scmp.ne.s32.totalorder %s71, %s73
    %p77 = scmp.eq.s32.totalorder %s16, 0
    %p78 = por %p76, %p77
    %p79 = scmp.ne.s32.totalorder %s71, %s73
    %p80 = scmp.eq.s32.totalorder %s21, 1
    %p81 = por %p79, %p80
    %p82 = scmp.ne.s32.totalorder %s73, %s74
    %p83 = scmp.eq.s32.totalorder %s21, 0
    %p84 = por %p82, %p83
    %p85 = scmp.ne.s32.totalorder %s73, %s74
    %p86 = scmp.eq.s32.totalorder %s22, 1
    %p87 = por %p85, %p86
    %p89 = scmp.ne.s32.totalorder %s74, %s88
    %p90 = scmp.eq.s32.totalorder %s22, 0
    %p91 = por %p89, %p90
    %s93 = sadd.s32 %s92, 1
    %p96 = scmp.eq.s32.totalorder %s16, 1
    %p97 = scmp.ne.s32.totalorder %s92, %s94
    %p98 = scmp.eq.s32.totalorder %s16, 0
    %p99 = por %p97, %p98
    %p100 = scmp.ne.s32.totalorder %s92, %s94
    %p101 = scmp.eq.s32.totalorder %s21, 1
    %p102 = por %p100, %p101
    %p103 = scmp.ne.s32.totalorder %s94, %s95
    %p104 = scmp.eq.s32.totalorder %s21, 0
    %p105 = por %p103, %p104
    %p106 = scmp.ne.s32.totalorder %s94, %s95
    %p107 = scmp.eq.s32.totalorder %s22, 1
    %p108 = por %p106, %p107
    %p110 = scmp.ne.s32.totalorder %s95, %s109
    %p111 = scmp.eq.s32.totalorder %s22, 0
    %p112 = por %p110, %p111
    %s114 = sadd.s32 %s113, 1
    %p117 = scmp.eq.s32.totalorder %s16, 1
    %p118 = scmp.ne.s32.totalorder %s113, %s115
    %p119 = scmp.eq.s32.totalorder %s16, 0
    %p120 = por %p118, %p119
    %p121 = scmp.ne.s32.totalorder %s113, %s115
    %p122 = scmp.eq.s32.totalorder %s21, 1
    %p123 = por %p121, %p122
    %p124 = scmp.ne.s32.totalorder %s115, %s116
    %p125 = scmp.eq.s32.totalorder %s21, 0
    %p126 = por %p124, %p125
    %p127 = scmp.ne.s32.totalorder %s115, %s116
    %p128 = scmp.eq.s32.totalorder %s22, 1
    %p129 = por %p127, %p128
    %p131 = scmp.ne.s32.totalorder %s116, %s130
    %p132 = scmp.eq.s32.totalorder %s22, 0
    %p133 = por %p131, %p132
    %s135 = sadd.s32 %s134, 1
    %p138 = scmp.eq.s32.totalorder %s16, 1
    %p139 = scmp.ne.s32.totalorder %s134, %s136
    %p140 = scmp.eq.s32.totalorder %s16, 0
    %p141 = por %p139, %p140
    %p142 = scmp.ne.s32.totalorder %s134, %s136
    %p143 = scmp.eq.s32.totalorder %s21, 1
    %p144 = por %p142, %p143
    %p145 = scmp.ne.s32.totalorder %s136, %s137
    %p146 = scmp.eq.s32.totalorder %s21, 0
    %p147 = por %p145, %p146
    %p148 = scmp.ne.s32.totalorder %s136, %s137
    %p149 = scmp.eq.s32.totalorder %s22, 1
    %p150 = por %p148, %p149
    %p152 = scmp.ne.s32.totalorder %s137, %s151
    %p153 = scmp.eq.s32.totalorder %s22, 0
    %p154 = por %p152, %p153
    %s156 = sadd.s32 %s155, 1
    %p159 = scmp.eq.s32.totalorder %s16, 1
    %p160 = scmp.ne.s32.totalorder %s155, %s157
    %p161 = scmp.eq.s32.totalorder %s16, 0
    %p162 = por %p160, %p161
    %p163 = scmp.ne.s32.totalorder %s155, %s157
    %p164 = scmp.eq.s32.totalorder %s21, 1
    %p165 = por %p163, %p164
    %p166 = scmp.ne.s32.totalorder %s157, %s158
    %p167 = scmp.eq.s32.totalorder %s21, 0
    %p168 = por %p166, %p167
    %p169 = scmp.ne.s32.totalorder %s157, %s158
    %p170 = scmp.eq.s32.totalorder %s22, 1
    %p171 = por %p169, %p170
    %p173 = scmp.ne.s32.totalorder %s158, %s172
    %p174 = scmp.eq.s32.totalorder %s22, 0
    %p175 = por %p173, %p174
    %s177 = sadd.s32 %s176, 1
    %p180 = scmp.eq.s32.totalorder %s16, 1
    %p181 = scmp.ne.s32.totalorder %s176, %s178
    %p182 = scmp.eq.s32.totalorder %s16, 0
    %p183 = por %p181, %p182
    %p184 = scmp.ne.s32.totalorder %s176, %s178
    %p185 = scmp.eq.s32.totalorder %s21, 1
    %p186 = por %p184, %p185
    %p187 = scmp.ne.s32.totalorder %s178, %s179
    %p188 = scmp.eq.s32.totalorder %s21, 0
    %p189 = por %p187, %p188
    %p190 = scmp.ne.s32.totalorder %s178, %s179
    %p191 = scmp.eq.s32.totalorder %s22, 1
    %p192 = por %p190, %p191
    %p194 = scmp.ne.s32.totalorder %s179, %s193
    %p195 = scmp.eq.s32.totalorder %s22, 0
    %p196 = por %p194, %p195
    %s197 = ssub.s32 %s16, %s23
    %p198 = scmp.eq.s32.totalorder %s197, 0
    %s200 = sadd.s32 %s199, 1
    %s201 = scalar_select %p198, %s199, %s200
    %p204 = pneg %p198
    %p205 = scmp.eq.s32.totalorder %s16, 1
    %p206 = por %p204, %p205
    %p207 = scmp.ne.s32.totalorder %s199, %s202
    %p208 = scmp.eq.s32.totalorder %s16, 0
    %p209 = por %p207, %p208
    %p210 = scmp.ne.s32.totalorder %s199, %s202
    %p211 = scmp.eq.s32.totalorder %s21, 1
    %p212 = por %p210, %p211
    %p213 = scmp.ne.s32.totalorder %s202, %s203
    %p214 = scmp.eq.s32.totalorder %s21, 0
    %p215 = por %p213, %p214
    %p216 = scmp.ne.s32.totalorder %s202, %s203
    %p217 = scmp.eq.s32.totalorder %s22, 1
    %p218 = por %p216, %p217
    %p220 = scmp.ne.s32.totalorder %s203, %s219
    %p221 = scmp.eq.s32.totalorder %s22, 0
    %p222 = por %p220, %p221
    %s223 = ssub.s32 %s16, %s23
    %p224 = scmp.eq.s32.totalorder %s223, 0
    %s226 = sadd.s32 %s225, 1
    %s227 = scalar_select %p224, %s225, %s226
    %p230 = pneg %p224
    %p231 = scmp.eq.s32.totalorder %s16, 1
    %p232 = por %p230, %p231
    %p233 = scmp.ne.s32.totalorder %s225, %s228
    %p234 = scmp.eq.s32.totalorder %s16, 0
    %p235 = por %p233, %p234
    %p236 = scmp.ne.s32.totalorder %s225, %s228
    %p237 = scmp.eq.s32.totalorder %s21, 1
    %p238 = por %p236, %p237
    %p239 = scmp.ne.s32.totalorder %s228, %s229
    %p240 = scmp.eq.s32.totalorder %s21, 0
    %p241 = por %p239, %p240
    %p242 = scmp.ne.s32.totalorder %s228, %s229
    %p243 = scmp.eq.s32.totalorder %s22, 1
    %p244 = por %p242, %p243
    %p246 = scmp.ne.s32.totalorder %s229, %s245
    %p247 = scmp.eq.s32.totalorder %s22, 0
    %p248 = por %p246, %p247
    %p249 = scmp.le.s32.totalorder 1, %s16
    %p250 = scmp.lt.s32.totalorder %s16, 3
    %p251 = pnand %p249, %p250
    %p252 = pneg %p251
    // Predicated region
    $region9: #{downsampling_bottleneck.1} parent=5 // pred_check
      _
    $region10: #{downsampling_bottleneck.1} parent=5 // pred_check_branch
      %254 = sbr.rel (%p251) target = $region12
    $region11: #{downsampling_bottleneck.1} parent=5 // pred_region
      %s255 = ssub.s32 %s16, 1
      // Predicated region
      $region13: #{downsampling_bottleneck.1} parent=11 // pred_check
        %p256 = pneg %p63
      $region14: #{downsampling_bottleneck.1} parent=11 // pred_check_branch
        %258 = sbr.rel (%p256) target = $region16
      $region15: #{downsampling_bottleneck.1} parent=11 // pred_region
        _
      $region16: #{downsampling_bottleneck.1} parent=11 // pred_fallthru
        _
      // Predicated region
      $region17: #{downsampling_bottleneck.1} parent=11 // pred_check
        %p259 = pneg %p84
      $region18: #{downsampling_bottleneck.1} parent=11 // pred_check_branch
        %261 = sbr.rel (%p259) target = $region20
      $region19: #{downsampling_bottleneck.1} parent=11 // pred_region
        _
      $region20: #{downsampling_bottleneck.1} parent=11 // pred_fallthru
        _
      // Predicated region
      $region21: #{downsampling_bottleneck.1} parent=11 // pred_check
        %p262 = pneg %p105
      $region22: #{downsampling_bottleneck.1} parent=11 // pred_check_branch
        %264 = sbr.rel (%p262) target = $region24
      $region23: #{downsampling_bottleneck.1} parent=11 // pred_region
        _
      $region24: #{downsampling_bottleneck.1} parent=11 // pred_fallthru
        _
      // Predicated region
      $region25: #{downsampling_bottleneck.1} parent=11 // pred_check
        %p265 = pneg %p126
      $region26: #{downsampling_bottleneck.1} parent=11 // pred_check_branch
        %267 = sbr.rel (%p265) target = $region28
      $region27: #{downsampling_bottleneck.1} parent=11 // pred_region
        _
      $region28: #{downsampling_bottleneck.1} parent=11 // pred_fallthru
        _
      // Predicated region
      $region29: #{downsampling_bottleneck.1} parent=11 // pred_check
        %p268 = pneg %p147
      $region30: #{downsampling_bottleneck.1} parent=11 // pred_check_branch
        %270 = sbr.rel (%p268) target = $region32
      $region31: #{downsampling_bottleneck.1} parent=11 // pred_region
        _
      $region32: #{downsampling_bottleneck.1} parent=11 // pred_fallthru
        _
      // Predicated region
      $region33: #{downsampling_bottleneck.1} parent=11 // pred_check
        %p271 = pneg %p168
      $region34: #{downsampling_bottleneck.1} parent=11 // pred_check_branch
        %273 = sbr.rel (%p271) target = $region36
      $region35: #{downsampling_bottleneck.1} parent=11 // pred_region
        _
      $region36: #{downsampling_bottleneck.1} parent=11 // pred_fallthru
        _
      // Predicated region
      $region37: #{downsampling_bottleneck.1} parent=11 // pred_check
        %p274 = pneg %p189
      $region38: #{downsampling_bottleneck.1} parent=11 // pred_check_branch
        %276 = sbr.rel (%p274) target = $region40
      $region39: #{downsampling_bottleneck.1} parent=11 // pred_region
        _
      $region40: #{downsampling_bottleneck.1} parent=11 // pred_fallthru
        _
    $region12: #{downsampling_bottleneck.1} parent=5 // pred_fallthru
      _
    %p277 = scmp.lt.s32.totalorder %s16, 2
    // Predicated region
    $region41: #{downsampling_bottleneck.1} parent=5 // pred_check
      %p278 = pneg %p277
    $region42: #{downsampling_bottleneck.1} parent=5 // pred_check_branch
      %280 = sbr.rel (%p278) target = $region44
    $region43: #{downsampling_bottleneck.1} parent=5 // pred_region
      // Predicated region
      $region45: #{downsampling_bottleneck.1} parent=43 // pred_check
        %p281 = pneg %p36
      $region46: #{downsampling_bottleneck.1} parent=43 // pred_check_branch
        %283 = sbr.rel (%p281) target = $region48
      $region47: #{downsampling_bottleneck.1} parent=43 // pred_region
        %p284 = scmp.lt.s32.totalorder %s16, 1
        %s285 = scalar_select %p284, %s16, 1
        %s286 = smul.addr %s285, 4
        %s287 = smul.addr %s286, 8
        %s288 = scalar_lea.vmem %s0, %s287
      $region48: #{downsampling_bottleneck.1} parent=43 // pred_fallthru
        _
    $region44: #{downsampling_bottleneck.1} parent=5 // pred_fallthru
      _
    %p289 = scmp.le.s32.totalorder 1, %s16
    %p290 = scmp.lt.s32.totalorder %s16, 3
    %p291 = pnand %p289, %p290
    %p292 = pneg %p291
    // Predicated region
    $region49: #{downsampling_bottleneck.1} parent=5 // pred_check
      _
    $region50: #{downsampling_bottleneck.1} parent=5 // pred_check_branch
      %294 = sbr.rel (%p291) target = $region52
    $region51: #{downsampling_bottleneck.1} parent=5 // pred_region
      %s295 = ssub.s32 %s16, 1
      %p296 = scmp.lt.s32.totalorder %s21, 1
      %s297 = scalar_select %p296, %s21, 1
      %s298 = smul.addr %s297, 4
      %s299 = smul.addr %s298, 8
      %s300 = scalar_lea.vmem %s0, %s299
      %p301 = pneg %p42
      %p302 = pneg %p39
      %p303 = pneg %p63
      %p304 = pneg %p60
      %p305 = pneg %p84
      %p306 = pneg %p81
      %p307 = pneg %p105
      %p308 = pneg %p102
      %p309 = pneg %p126
      %p310 = pneg %p123
      %p311 = pneg %p147
      %p312 = pneg %p144
      %p313 = pneg %p168
      %p314 = pneg %p165
      %p315 = pneg %p189
      %p316 = pneg %p186
      %p317 = pneg %p215
      %p318 = pneg %p212
      %p319 = scmp.lt.s32.totalorder %s21, 1
      %s320 = scalar_select %p319, %s21, 1
      %s321 = smul.addr %s320, 2
      %s322 = smul.addr %s321, 8
      %s323 = scalar_lea.vmem %s8, %s322
      %p324 = pneg %p241
      %p325 = pneg %p238
      %p326 = scmp.lt.s32.totalorder %s21, 1
      %s327 = scalar_select %p326, %s21, 1
      %s328 = smul.addr %s327, 8
      %s329 = scalar_lea.vmem %s9, %s328
      %p330 = scmp.lt.s32.totalorder %s21, 1
      %s331 = scalar_select %p330, %s21, 1
      %s332 = smul.addr %s331, 4
      %s333 = smul.addr %s332, 8
      %s334 = scalar_lea.vmem %s0, %s333
      %p335 = scmp.lt.s32.totalorder %s21, 1
      %s336 = scalar_select %p335, %s21, 1
      %s337 = smul.addr %s336, 2
      %s338 = smul.addr %s337, 8
      %s339 = scalar_lea.vmem %s8, %s338
      %p340 = scmp.lt.s32.totalorder %s21, 1
      %s341 = scalar_select %p340, %s21, 1
      %s342 = smul.addr %s341, 8
      %s343 = scalar_lea.vmem %s9, %s342
      %v344 = vld [vmem:[%s334] sm:$0xff]
      %v345 = vld [vmem:[%s334 + $0x8] sm:$0xff]
      %v346 = vld [vmem:[%s334 + $0x10] sm:$0xff]
      %v347 = vld [vmem:[%s334 + $0x18] sm:$0xff]
      %v348 = vld [vmem:[%s2] sm:$0x3]
      %v349 = vld [vmem:[%s3] sm:$0x3]
      %351 = vset.pattern.permute.xlu0 0
      %352 = vperm.xlu0 %351, %v349
      %v353 = vpop.permute.xlu0 %352
      %vm355 = vcmask 261120
      %v357 = vsel %vm355, %v348, 0
      %359 = vmatprep.subr.mxu0 0.0
      %360 = vmatpush1.msra.mxu0 %v344
      %361 = vmatprep.subr.mxu0 0.0
      %362 = vmatpush1.msra.mxu0 %v345
      %363 = vmatprep.subr.mxu0 0.0
      %364 = vmatpush1.msra.mxu0 %v346
      %365 = vmatprep.subr.mxu0 0.0
      %366 = vmatpush1.msra.mxu0 %v347
      %367 = vmatprep.subr.mxu0 0.0
      %368 = vmatpush1.msra.mxu0 0.0
      %369 = vmatprep.subr.mxu0 0.0
      %370 = vmatpush1.msra.mxu0 0.0
      %371 = vmatprep.subr.mxu0 0.0
      %372 = vmatpush1.msra.mxu0 0.0
      %373 = vmatprep.subr.mxu0 0.0
      %374 = vmatpush1.msra.mxu0 0.0
      %375 = vmatprep.subr.mxu0 0.0
      %376 = vmatpush1.msra.mxu0 0.0
      %377 = vmatprep.subr.mxu0 0.0
      %378 = vmatpush1.msra.mxu0 0.0
      %379 = vmatprep.subr.mxu0 0.0
      %380 = vmatpush1.msra.mxu0 0.0
      %381 = vmatprep.subr.mxu0 0.0
      %382 = vmatpush1.msra.mxu0 0.0
      %383 = vmatprep.subr.mxu0 0.0
      %384 = vmatpush1.msra.mxu0 0.0
      %385 = vmatprep.subr.mxu0 0.0
      %386 = vmatpush1.msra.mxu0 0.0
      %387 = vmatprep.subr.mxu0 0.0
      %388 = vmatpush1.msra.mxu0 0.0
      %389 = vmatprep.subr.mxu0 0.0
      %390 = vmatpush1.msra.mxu0 0.0
      %391 = vmatprep.subr.mxu0 0.0
      %392 = vmatpush1.msra.mxu0 0.0
      %393 = vmatprep.subr.mxu0 0.0
      %394 = vmatpush1.msra.mxu0 0.0
      %395 = vmatprep.subr.mxu0 0.0
      %396 = vmatpush1.msra.mxu0 0.0
      %397 = vmatprep.subr.mxu0 0.0
      %398 = vmatpush1.msra.mxu0 0.0
      %399 = vmatprep.subr.mxu0 0.0
      %400 = vmatpush1.msra.mxu0 0.0
      %401 = vmatprep.subr.mxu0 0.0
      %402 = vmatpush1.msra.mxu0 0.0
      %403 = vmatprep.subr.mxu0 0.0
      %404 = vmatpush1.msra.mxu0 0.0
      %405 = vmatprep.subr.mxu0 0.0
      %406 = vmatpush1.msra.mxu0 0.0
      %407 = vmatprep.subr.mxu0 0.0
      %408 = vmatpush1.msra.mxu0 0.0
      %409 = vmatprep.subr.mxu0 0.0
      %410 = vmatpush1.msra.mxu0 0.0
      %411 = vmatprep.subr.mxu0 0.0
      %412 = vmatpush1.msra.mxu0 0.0
      %413 = vmatprep.subr.mxu0 0.0
      %414 = vmatpush1.msra.mxu0 0.0
      %415 = vmatprep.subr.mxu0 0.0
      %416 = vmatpush1.msra.mxu0 0.0
      %417 = vmatprep.subr.mxu0 0.0
      %418 = vmatpush1.msra.mxu0 0.0
      %419 = vmatprep.subr.mxu0 0.0
      %420 = vmatpush1.msra.mxu0 0.0
      %421 = vmatprep.subr.mxu0 0.0
      %422 = vmatpush1.msra.mxu0 0.0
      %423 = vmatprep.mubr.f32.mxu0 0.0
      %424 = vmatmul.mubr.f32.gmra.mrb[0].mxu0 %v357
      %v425 = vpop.f32.mrb[0].mxu0
      %v426 = vadd.f32 %v353, %v425
      %v427 = vpop.f32.mrb[0].mxu0
      %428 = vdwg.mxu0
      %v429 = vmax.f32 %v426, 0.0
      %vm430 = vcmask 66560
      %431 = vst.msk [vmem:[#allocation2] sm:$0x3] %vm430, 0.0
      %vm432 = vcmask 665160
      %433 = vst.msk [vmem:[#allocation2] sm:$0x3] %vm432, 0.0
      %435 = vrot.lane.b32.xlu0 %v429, 9
      %v436 = vpop.permute.xlu0 %435
      %vm438 = vcmask 590920
      %439 = vst.msk [vmem:[#allocation2] sm:$0x3] %vm438, %v436
      %v440 = vld [vmem:[%s1 + $0x1] sm:$0x1]
      %v441 = vld [vmem:[%s1 + $0x2] sm:$0x1]
      %v442 = vld [vmem:[#allocation2] sm:$0x3]
      %v443 = vlaneseq
      %v444 = vshrl.u32 %v443, 7
      %v445 = vsub.s32 0, %v444
      %v446 = vrot.slane %v440, %v445
      %v447 = vmul.f32 %v442, %v446
      %v448 = vld [vmem:[%s4] sm:$0x3]
      %s449 = scalar_lea.vmem %s4, 2
      %v450 = vld [vmem:[%s449] sm:$0x3]
      %452 = vrot.lane.b32.xlu0 %v442, 127
      %v453 = vpop.permute.xlu0 %452
      %vm454 = vcmask 15360
      %v456 = vsel %vm454, %v450, 0
      %vm458 = vcmask 1041408
      %v459 = vsel %vm458, %v453, 0
      %461 = vmatprep.subr.mxu0 0.0
      %462 = vmatpush1.msra.mxu0 %v459
      %463 = vmatprep.subr.mxu0 0.0
      %464 = vmatpush1.msra.mxu0 0.0
      %465 = vmatprep.subr.mxu0 0.0
      %466 = vmatpush1.msra.mxu0 0.0
      %467 = vmatprep.subr.mxu0 0.0
      %468 = vmatpush1.msra.mxu0 0.0
      %469 = vmatprep.subr.mxu0 0.0
      %470 = vmatpush1.msra.mxu0 0.0
      %471 = vmatprep.subr.mxu0 0.0
      %472 = vmatpush1.msra.mxu0 0.0
      %473 = vmatprep.subr.mxu0 0.0
      %474 = vmatpush1.msra.mxu0 0.0
      %475 = vmatprep.subr.mxu0 0.0
      %476 = vmatpush1.msra.mxu0 0.0
      %477 = vmatprep.subr.mxu0 0.0
      %478 = vmatpush1.msra.mxu0 0.0
      %479 = vmatprep.subr.mxu0 0.0
      %480 = vmatpush1.msra.mxu0 0.0
      %481 = vmatprep.subr.mxu0 0.0
      %482 = vmatpush1.msra.mxu0 0.0
      %483 = vmatprep.subr.mxu0 0.0
      %484 = vmatpush1.msra.mxu0 0.0
      %485 = vmatprep.subr.mxu0 0.0
      %486 = vmatpush1.msra.mxu0 0.0
      %487 = vmatprep.subr.mxu0 0.0
      %488 = vmatpush1.msra.mxu0 0.0
      %489 = vmatprep.subr.mxu0 0.0
      %490 = vmatpush1.msra.mxu0 0.0
      %491 = vmatprep.subr.mxu0 0.0
      %492 = vmatpush1.msra.mxu0 0.0
      %493 = vmatprep.subr.mxu0 0.0
      %494 = vmatpush1.msra.mxu0 0.0
      %495 = vmatprep.subr.mxu0 0.0
      %496 = vmatpush1.msra.mxu0 0.0
      %497 = vmatprep.subr.mxu0 0.0
      %498 = vmatpush1.msra.mxu0 0.0
      %499 = vmatprep.subr.mxu0 0.0
      %500 = vmatpush1.msra.mxu0 0.0
      %501 = vmatprep.subr.mxu0 0.0
      %502 = vmatpush1.msra.mxu0 0.0
      %503 = vmatprep.subr.mxu0 0.0
      %504 = vmatpush1.msra.mxu0 0.0
      %505 = vmatprep.subr.mxu0 0.0
      %506 = vmatpush1.msra.mxu0 0.0
      %507 = vmatprep.subr.mxu0 0.0
      %508 = vmatpush1.msra.mxu0 0.0
      %509 = vmatprep.subr.mxu0 0.0
      %510 = vmatpush1.msra.mxu0 0.0
      %511 = vmatprep.subr.mxu0 0.0
      %512 = vmatpush1.msra.mxu0 0.0
      %513 = vmatprep.subr.mxu0 0.0
      %514 = vmatpush1.msra.mxu0 0.0
      %515 = vmatprep.subr.mxu0 0.0
      %516 = vmatpush1.msra.mxu0 0.0
      %517 = vmatprep.subr.mxu0 0.0
      %518 = vmatpush1.msra.mxu0 0.0
      %519 = vmatprep.subr.mxu0 0.0
      %520 = vmatpush1.msra.mxu0 0.0
      %521 = vmatprep.subr.mxu0 0.0
      %522 = vmatpush1.msra.mxu0 0.0
      %523 = vmatprep.subr.mxu0 0.0
      %524 = vmatpush1.msra.mxu0 0.0
      %525 = vmatprep.mubr.f32.mxu0 0.0
      %526 = vmatmul.mubr.f32.gmra.mrb[0].mxu0 %v456
      %v527 = vpop.f32.mrb[0].mxu0
      %v528 = vadd.f32 0.0, %v527
      %v529 = vpop.f32.mrb[0].mxu0
      %530 = vdwg.mxu0
      %v532 = vsel %vm454, %v448, 0
      %v535 = vsel %vm458, %v447, 0
      %537 = vmatprep.subr.mxu0 0.0
      %538 = vmatpush1.msra.mxu0 %v535
      %539 = vmatprep.subr.mxu0 0.0
      %540 = vmatpush1.msra.mxu0 0.0
      %541 = vmatprep.subr.mxu0 0.0
      %542 = vmatpush1.msra.mxu0 0.0
      %543 = vmatprep.subr.mxu0 0.0
      %544 = vmatpush1.msra.mxu0 0.0
      %545 = vmatprep.subr.mxu0 0.0
      %546 = vmatpush1.msra.mxu0 0.0
      %547 = vmatprep.subr.mxu0 0.0
      %548 = vmatpush1.msra.mxu0 0.0
      %549 = vmatprep.subr.mxu0 0.0
      %550 = vmatpush1.msra.mxu0 0.0
      %551 = vmatprep.subr.mxu0 0.0
      %552 = vmatpush1.msra.mxu0 0.0
      %553 = vmatprep.subr.mxu0 0.0
      %554 = vmatpush1.msra.mxu0 0.0
      %555 = vmatprep.subr.mxu0 0.0
      %556 = vmatpush1.msra.mxu0 0.0
      %557 = vmatprep.subr.mxu0 0.0
      %558 = vmatpush1.msra.mxu0 0.0
      %559 = vmatprep.subr.mxu0 0.0
      %560 = vmatpush1.msra.mxu0 0.0
      %561 = vmatprep.subr.mxu0 0.0
      %562 = vmatpush1.msra.mxu0 0.0
      %563 = vmatprep.subr.mxu0 0.0
      %564 = vmatpush1.msra.mxu0 0.0
      %565 = vmatprep.subr.mxu0 0.0
      %566 = vmatpush1.msra.mxu0 0.0
      %567 = vmatprep.subr.mxu0 0.0
      %568 = vmatpush1.msra.mxu0 0.0
      %569 = vmatprep.subr.mxu0 0.0
      %570 = vmatpush1.msra.mxu0 0.0
      %571 = vmatprep.subr.mxu0 0.0
      %572 = vmatpush1.msra.mxu0 0.0
      %573 = vmatprep.subr.mxu0 0.0
      %574 = vmatpush1.msra.mxu0 0.0
      %575 = vmatprep.subr.mxu0 0.0
      %576 = vmatpush1.msra.mxu0 0.0
      %577 = vmatprep.subr.mxu0 0.0
      %578 = vmatpush1.msra.mxu0 0.0
      %579 = vmatprep.subr.mxu0 0.0
      %580 = vmatpush1.msra.mxu0 0.0
      %581 = vmatprep.subr.mxu0 0.0
      %582 = vmatpush1.msra.mxu0 0.0
      %583 = vmatprep.subr.mxu0 0.0
      %584 = vmatpush1.msra.mxu0 0.0
      %585 = vmatprep.subr.mxu0 0.0
      %586 = vmatpush1.msra.mxu0 0.0
      %587 = vmatprep.subr.mxu0 0.0
      %588 = vmatpush1.msra.mxu0 0.0
      %589 = vmatprep.subr.mxu0 0.0
      %590 = vmatpush1.msra.mxu0 0.0
      %591 = vmatprep.subr.mxu0 0.0
      %592 = vmatpush1.msra.mxu0 0.0
      %593 = vmatprep.subr.mxu0 0.0
      %594 = vmatpush1.msra.mxu0 0.0
      %595 = vmatprep.subr.mxu0 0.0
      %596 = vmatpush1.msra.mxu0 0.0
      %597 = vmatprep.subr.mxu0 0.0
      %598 = vmatpush1.msra.mxu0 0.0
      %599 = vmatprep.subr.mxu0 0.0
      %600 = vmatpush1.msra.mxu0 0.0
      %601 = vmatprep.mubr.f32.mxu0 0.0
      %602 = vmatmul.mubr.f32.gmra.mrb[0].mxu0 %v532
      %v603 = vpop.f32.mrb[0].mxu0
      %v604 = vadd.f32 %v528, %v603
      %v605 = vpop.f32.mrb[0].mxu0
      %606 = vdwg.mxu0
      %v607 = vlaneseq
      %v608 = vshrl.u32 %v607, 7
      %v609 = vsub.s32 0, %v608
      %v610 = vrot.slane %v441, %v609
      %612 = vrot.lane.b32.xlu0 %v610, 2
      %v613 = vpop.permute.xlu0 %612
      %v615 = vmul.f32 %v442, %v613
      %s616 = scalar_lea.vmem %s4, 4
      %v617 = vld [vmem:[%s616] sm:$0x3]
      %619 = vrot.lane.b32.xlu0 %v615, 126
      %v620 = vpop.permute.xlu0 %619
      %v622 = vsel %vm454, %v617, 0
      %v624 = vsel %vm458, %v620, 0
      %626 = vmatprep.subr.mxu0 0.0
      %627 = vmatpush1.msra.mxu0 %v624
      %628 = vmatprep.subr.mxu0 0.0
      %629 = vmatpush1.msra.mxu0 0.0
      %630 = vmatprep.subr.mxu0 0.0
      %631 = vmatpush1.msra.mxu0 0.0
      %632 = vmatprep.subr.mxu0 0.0
      %633 = vmatpush1.msra.mxu0 0.0
      %634 = vmatprep.subr.mxu0 0.0
      %635 = vmatpush1.msra.mxu0 0.0
      %636 = vmatprep.subr.mxu0 0.0
      %637 = vmatpush1.msra.mxu0 0.0
      %638 = vmatprep.subr.mxu0 0.0
      %639 = vmatpush1.msra.mxu0 0.0
      %640 = vmatprep.subr.mxu0 0.0
      %641 = vmatpush1.msra.mxu0 0.0
      %642 = vmatprep.subr.mxu0 0.0
      %643 = vmatpush1.msra.mxu0 0.0
      %644 = vmatprep.subr.mxu0 0.0
      %645 = vmatpush1.msra.mxu0 0.0
      %646 = vmatprep.subr.mxu0 0.0
      %647 = vmatpush1.msra.mxu0 0.0
      %648 = vmatprep.subr.mxu0 0.0
      %649 = vmatpush1.msra.mxu0 0.0
      %650 = vmatprep.subr.mxu0 0.0
      %651 = vmatpush1.msra.mxu0 0.0
      %652 = vmatprep.subr.mxu0 0.0
      %653 = vmatpush1.msra.mxu0 0.0
      %654 = vmatprep.subr.mxu0 0.0
      %655 = vmatpush1.msra.mxu0 0.0
      %656 = vmatprep.subr.mxu0 0.0
      %657 = vmatpush1.msra.mxu0 0.0
      %658 = vmatprep.subr.mxu0 0.0
      %659 = vmatpush1.msra.mxu0 0.0
      %660 = vmatprep.subr.mxu0 0.0
      %661 = vmatpush1.msra.mxu0 0.0
      %662 = vmatprep.subr.mxu0 0.0
      %663 = vmatpush1.msra.mxu0 0.0
      %664 = vmatprep.subr.mxu0 0.0
      %665 = vmatpush1.msra.mxu0 0.0
      %666 = vmatprep.subr.mxu0 0.0
      %667 = vmatpush1.msra.mxu0 0.0
      %668 = vmatprep.subr.mxu0 0.0
      %669 = vmatpush1.msra.mxu0 0.0
      %670 = vmatprep.subr.mxu0 0.0
      %671 = vmatpush1.msra.mxu0 0.0
      %672 = vmatprep.subr.mxu0 0.0
      %673 = vmatpush1.msra.mxu0 0.0
      %674 = vmatprep.subr.mxu0 0.0
      %675 = vmatpush1.msra.mxu0 0.0
      %676 = vmatprep.subr.mxu0 0.0
      %677 = vmatpush1.msra.mxu0 0.0
      %678 = vmatprep.subr.mxu0 0.0
      %679 = vmatpush1.msra.mxu0 0.0
      %680 = vmatprep.subr.mxu0 0.0
      %681 = vmatpush1.msra.mxu0 0.0
      %682 = vmatprep.subr.mxu0 0.0
      %683 = vmatpush1.msra.mxu0 0.0
      %684 = vmatprep.subr.mxu0 0.0
      %685 = vmatpush1.msra.mxu0 0.0
      %686 = vmatprep.subr.mxu0 0.0
      %687 = vmatpush1.msra.mxu0 0.0
      %688 = vmatprep.subr.mxu0 0.0
      %689 = vmatpush1.msra.mxu0 0.0
      %690 = vmatprep.mubr.f32.mxu0 0.0
      %691 = vmatmul.mubr.f32.gmra.mrb[0].mxu0 %v622
      %v692 = vpop.f32.mrb[0].mxu0
      %v693 = vadd.f32 0.0, %v692
      %v694 = vpop.f32.mrb[0].mxu0
      %695 = vdwg.mxu0
      %v696 = vadd.f32 %v604, %v693
      %698 = vrot.lane.b32.xlu0 %v446, 8
      %v699 = vpop.permute.xlu0 %698
      %v701 = vmul.f32 %v442, %v699
      %s702 = scalar_lea.vmem %s4, 6
      %v703 = vld [vmem:[%s702] sm:$0x3]
      %705 = vrot.lane.b32.xlu0 %v701, 120
      %v706 = vpop.permute.xlu0 %705
      %v708 = vsel %vm454, %v703, 0
      %v710 = vsel %vm458, %v706, 0
      %712 = vmatprep.subr.mxu0 0.0
      %713 = vmatpush1.msra.mxu0 %v710
      %714 = vmatprep.subr.mxu0 0.0
      %715 = vmatpush1.msra.mxu0 0.0
      %716 = vmatprep.subr.mxu0 0.0
      %717 = vmatpush1.msra.mxu0 0.0
      %718 = vmatprep.subr.mxu0 0.0
      %719 = vmatpush1.msra.mxu0 0.0
      %720 = vmatprep.subr.mxu0 0.0
      %721 = vmatpush1.msra.mxu0 0.0
      %722 = vmatprep.subr.mxu0 0.0
      %723 = vmatpush1.msra.mxu0 0.0
      %724 = vmatprep.subr.mxu0 0.0
      %725 = vmatpush1.msra.mxu0 0.0
      %726 = vmatprep.subr.mxu0 0.0
      %727 = vmatpush1.msra.mxu0 0.0
      %728 = vmatprep.subr.mxu0 0.0
      %729 = vmatpush1.msra.mxu0 0.0
      %730 = vmatprep.subr.mxu0 0.0
      %731 = vmatpush1.msra.mxu0 0.0
      %732 = vmatprep.subr.mxu0 0.0
      %733 = vmatpush1.msra.mxu0 0.0
      %734 = vmatprep.subr.mxu0 0.0
      %735 = vmatpush1.msra.mxu0 0.0
      %736 = vmatprep.subr.mxu0 0.0
      %737 = vmatpush1.msra.mxu0 0.0
      %738 = vmatprep.subr.mxu0 0.0
      %739 = vmatpush1.msra.mxu0 0.0
      %740 = vmatprep.subr.mxu0 0.0
      %741 = vmatpush1.msra.mxu0 0.0
      %742 = vmatprep.subr.mxu0 0.0
      %743 = vmatpush1.msra.mxu0 0.0
      %744 = vmatprep.subr.mxu0 0.0
      %745 = vmatpush1.msra.mxu0 0.0
      %746 = vmatprep.subr.mxu0 0.0
      %747 = vmatpush1.msra.mxu0 0.0
      %748 = vmatprep.subr.mxu0 0.0
      %749 = vmatpush1.msra.mxu0 0.0
      %750 = vmatprep.subr.mxu0 0.0
      %751 = vmatpush1.msra.mxu0 0.0
      %752 = vmatprep.subr.mxu0 0.0
      %753 = vmatpush1.msra.mxu0 0.0
      %754 = vmatprep.subr.mxu0 0.0
      %755 = vmatpush1.msra.mxu0 0.0
      %756 = vmatprep.subr.mxu0 0.0
      %757 = vmatpush1.msra.mxu0 0.0
      %758 = vmatprep.subr.mxu0 0.0
      %759 = vmatpush1.msra.mxu0 0.0
      %760 = vmatprep.subr.mxu0 0.0
      %761 = vmatpush1.msra.mxu0 0.0
      %762 = vmatprep.subr.mxu0 0.0
      %763 = vmatpush1.msra.mxu0 0.0
      %764 = vmatprep.subr.mxu0 0.0
      %765 = vmatpush1.msra.mxu0 0.0
      %766 = vmatprep.subr.mxu0 0.0
      %767 = vmatpush1.msra.mxu0 0.0
      %768 = vmatprep.subr.mxu0 0.0
      %769 = vmatpush1.msra.mxu0 0.0
      %770 = vmatprep.subr.mxu0 0.0
      %771 = vmatpush1.msra.mxu0 0.0
      %772 = vmatprep.subr.mxu0 0.0
      %773 = vmatpush1.msra.mxu0 0.0
      %774 = vmatprep.subr.mxu0 0.0
      %775 = vmatpush1.msra.mxu0 0.0
      %776 = vmatprep.mubr.f32.mxu0 0.0
      %777 = vmatmul.mubr.f32.gmra.mrb[0].mxu0 %v708
      %v778 = vpop.f32.mrb[0].mxu0
      %v779 = vadd.f32 0.0, %v778
      %v780 = vpop.f32.mrb[0].mxu0
      %781 = vdwg.mxu0
      %v782 = vadd.f32 %v696, %v779
      %s783 = scalar_lea.vmem %s4, 8
      %v784 = vld [vmem:[%s783] sm:$0x3]
      %785 = vrot.lane.b32.xlu0 %v442, 119
      %v786 = vpop.permute.xlu0 %785
      %v788 = vsel %vm454, %v784, 0
      %v790 = vsel %vm458, %v786, 0
      %792 = vmatprep.subr.mxu0 0.0
      %793 = vmatpush1.msra.mxu0 %v790
      %794 = vmatprep.subr.mxu0 0.0
      %795 = vmatpush1.msra.mxu0 0.0
      %796 = vmatprep.subr.mxu0 0.0
      %797 = vmatpush1.msra.mxu0 0.0
      %798 = vmatprep.subr.mxu0 0.0
      %799 = vmatpush1.msra.mxu0 0.0
      %800 = vmatprep.subr.mxu0 0.0
      %801 = vmatpush1.msra.mxu0 0.0
      %802 = vmatprep.subr.mxu0 0.0
      %803 = vmatpush1.msra.mxu0 0.0
      %804 = vmatprep.subr.mxu0 0.0
      %805 = vmatpush1.msra.mxu0 0.0
      %806 = vmatprep.subr.mxu0 0.0
      %807 = vmatpush1.msra.mxu0 0.0
      %808 = vmatprep.subr.mxu0 0.0
      %809 = vmatpush1.msra.mxu0 0.0
      %810 = vmatprep.subr.mxu0 0.0
      %811 = vmatpush1.msra.mxu0 0.0
      %812 = vmatprep.subr.mxu0 0.0
      %813 = vmatpush1.msra.mxu0 0.0
      %814 = vmatprep.subr.mxu0 0.0
      %815 = vmatpush1.msra.mxu0 0.0
      %816 = vmatprep.subr.mxu0 0.0
      %817 = vmatpush1.msra.mxu0 0.0
      %818 = vmatprep.subr.mxu0 0.0
      %819 = vmatpush1.msra.mxu0 0.0
      %820 = vmatprep.subr.mxu0 0.0
      %821 = vmatpush1.msra.mxu0 0.0
      %822 = vmatprep.subr.mxu0 0.0
      %823 = vmatpush1.msra.mxu0 0.0
      %824 = vmatprep.subr.mxu0 0.0
      %825 = vmatpush1.msra.mxu0 0.0
      %826 = vmatprep.subr.mxu0 0.0
      %827 = vmatpush1.msra.mxu0 0.0
      %828 = vmatprep.subr.mxu0 0.0
      %829 = vmatpush1.msra.mxu0 0.0
      %830 = vmatprep.subr.mxu0 0.0
      %831 = vmatpush1.msra.mxu0 0.0
      %832 = vmatprep.subr.mxu0 0.0
      %833 = vmatpush1.msra.mxu0 0.0
      %834 = vmatprep.subr.mxu0 0.0
      %835 = vmatpush1.msra.mxu0 0.0
      %836 = vmatprep.subr.mxu0 0.0
      %837 = vmatpush1.msra.mxu0 0.0
      %838 = vmatprep.subr.mxu0 0.0
      %839 = vmatpush1.msra.mxu0 0.0
      %840 = vmatprep.subr.mxu0 0.0
      %841 = vmatpush1.msra.mxu0 0.0
      %842 = vmatprep.subr.mxu0 0.0
      %843 = vmatpush1.msra.mxu0 0.0
      %844 = vmatprep.subr.mxu0 0.0
      %845 = vmatpush1.msra.mxu0 0.0
      %846 = vmatprep.subr.mxu0 0.0
      %847 = vmatpush1.msra.mxu0 0.0
      %848 = vmatprep.subr.mxu0 0.0
      %849 = vmatpush1.msra.mxu0 0.0
      %850 = vmatprep.subr.mxu0 0.0
      %851 = vmatpush1.msra.mxu0 0.0
      %852 = vmatprep.subr.mxu0 0.0
      %853 = vmatpush1.msra.mxu0 0.0
      %854 = vmatprep.subr.mxu0 0.0
      %855 = vmatpush1.msra.mxu0 0.0
      %856 = vmatprep.mubr.f32.mxu0 0.0
      %857 = vmatmul.mubr.f32.gmra.mrb[0].mxu0 %v788
      %v858 = vpop.f32.mrb[0].mxu0
      %v859 = vadd.f32 0.0, %v858
      %v860 = vpop.f32.mrb[0].mxu0
      %861 = vdwg.mxu0
      %v862 = vadd.f32 %v782, %v859
      %863 = vrot.lane.b32.xlu0 %v610, 10
      %v864 = vpop.permute.xlu0 %863
      %v866 = vmul.f32 %v442, %v864
      %s867 = scalar_lea.vmem %s4, 10
      %v868 = vld [vmem:[%s867] sm:$0x3]
      %870 = vrot.lane.b32.xlu0 %v866, 118
      %v871 = vpop.permute.xlu0 %870
      %v873 = vsel %vm454, %v868, 0
      %v875 = vsel %vm458, %v871, 0
      %877 = vmatprep.subr.mxu0 0.0
      %878 = vmatpush1.msra.mxu0 %v875
      %879 = vmatprep.subr.mxu0 0.0
      %880 = vmatpush1.msra.mxu0 0.0
      %881 = vmatprep.subr.mxu0 0.0
      %882 = vmatpush1.msra.mxu0 0.0
      %883 = vmatprep.subr.mxu0 0.0
      %884 = vmatpush1.msra.mxu0 0.0
      %885 = vmatprep.subr.mxu0 0.0
      %886 = vmatpush1.msra.mxu0 0.0
      %887 = vmatprep.subr.mxu0 0.0
      %888 = vmatpush1.msra.mxu0 0.0
      %889 = vmatprep.subr.mxu0 0.0
      %890 = vmatpush1.msra.mxu0 0.0
      %891 = vmatprep.subr.mxu0 0.0
      %892 = vmatpush1.msra.mxu0 0.0
      %893 = vmatprep.subr.mxu0 0.0
      %894 = vmatpush1.msra.mxu0 0.0
      %895 = vmatprep.subr.mxu0 0.0
      %896 = vmatpush1.msra.mxu0 0.0
      %897 = vmatprep.subr.mxu0 0.0
      %898 = vmatpush1.msra.mxu0 0.0
      %899 = vmatprep.subr.mxu0 0.0
      %900 = vmatpush1.msra.mxu0 0.0
      %901 = vmatprep.subr.mxu0 0.0
      %902 = vmatpush1.msra.mxu0 0.0
      %903 = vmatprep.subr.mxu0 0.0
      %904 = vmatpush1.msra.mxu0 0.0
      %905 = vmatprep.subr.mxu0 0.0
      %906 = vmatpush1.msra.mxu0 0.0
      %907 = vmatprep.subr.mxu0 0.0
      %908 = vmatpush1.msra.mxu0 0.0
      %909 = vmatprep.subr.mxu0 0.0
      %910 = vmatpush1.msra.mxu0 0.0
      %911 = vmatprep.subr.mxu0 0.0
      %912 = vmatpush1.msra.mxu0 0.0
      %913 = vmatprep.subr.mxu0 0.0
      %914 = vmatpush1.msra.mxu0 0.0
      %915 = vmatprep.subr.mxu0 0.0
      %916 = vmatpush1.msra.mxu0 0.0
      %917 = vmatprep.subr.mxu0 0.0
      %918 = vmatpush1.msra.mxu0 0.0
      %919 = vmatprep.subr.mxu0 0.0
      %920 = vmatpush1.msra.mxu0 0.0
      %921 = vmatprep.subr.mxu0 0.0
      %922 = vmatpush1.msra.mxu0 0.0
      %923 = vmatprep.subr.mxu0 0.0
      %924 = vmatpush1.msra.mxu0 0.0
      %925 = vmatprep.subr.mxu0 0.0
      %926 = vmatpush1.msra.mxu0 0.0
      %927 = vmatprep.subr.mxu0 0.0
      %928 = vmatpush1.msra.mxu0 0.0
      %929 = vmatprep.subr.mxu0 0.0
      %930 = vmatpush1.msra.mxu0 0.0
      %931 = vmatprep.subr.mxu0 0.0
      %932 = vmatpush1.msra.mxu0 0.0
      %933 = vmatprep.subr.mxu0 0.0
      %934 = vmatpush1.msra.mxu0 0.0
      %935 = vmatprep.subr.mxu0 0.0
      %936 = vmatpush1.msra.mxu0 0.0
      %937 = vmatprep.subr.mxu0 0.0
      %938 = vmatpush1.msra.mxu0 0.0
      %939 = vmatprep.subr.mxu0 0.0
      %940 = vmatpush1.msra.mxu0 0.0
      %941 = vmatprep.mubr.f32.mxu0 0.0
      %942 = vmatmul.mubr.f32.gmra.mrb[0].mxu0 %v873
      %v943 = vpop.f32.mrb[0].mxu0
      %v944 = vadd.f32 0.0, %v943
      %v945 = vpop.f32.mrb[0].mxu0
      %946 = vdwg.mxu0
      %v947 = vadd.f32 %v862, %v944
      %948 = vrot.lane.b32.xlu0 %v446, 16
      %v949 = vpop.permute.xlu0 %948
      %v951 = vmul.f32 %v442, %v949
      %s952 = scalar_lea.vmem %s4, 12
      %v953 = vld [vmem:[%s952] sm:$0x3]
      %955 = vrot.lane.b32.xlu0 %v951, 112
      %v956 = vpop.permute.xlu0 %955
      %v958 = vsel %vm454, %v953, 0
      %v960 = vsel %vm458, %v956, 0
      %962 = vmatprep.subr.mxu0 0.0
      %963 = vmatpush1.msra.mxu0 %v960
      %964 = vmatprep.subr.mxu0 0.0
      %965 = vmatpush1.msra.mxu0 0.0
      %966 = vmatprep.subr.mxu0 0.0
      %967 = vmatpush1.msra.mxu0 0.0
      %968 = vmatprep.subr.mxu0 0.0
      %969 = vmatpush1.msra.mxu0 0.0
      %970 = vmatprep.subr.mxu0 0.0
      %971 = vmatpush1.msra.mxu0 0.0
      %972 = vmatprep.subr.mxu0 0.0
      %973 = vmatpush1.msra.mxu0 0.0
      %974 = vmatprep.subr.mxu0 0.0
      %975 = vmatpush1.msra.mxu0 0.0
      %976 = vmatprep.subr.mxu0 0.0
      %977 = vmatpush1.msra.mxu0 0.0
      %978 = vmatprep.subr.mxu0 0.0
      %979 = vmatpush1.msra.mxu0 0.0
      %980 = vmatprep.subr.mxu0 0.0
      %981 = vmatpush1.msra.mxu0 0.0
      %982 = vmatprep.subr.mxu0 0.0
      %983 = vmatpush1.msra.mxu0 0.0
      %984 = vmatprep.subr.mxu0 0.0
      %985 = vmatpush1.msra.mxu0 0.0
      %986 = vmatprep.subr.mxu0 0.0
      %987 = vmatpush1.msra.mxu0 0.0
      %988 = vmatprep.subr.mxu0 0.0
      %989 = vmatpush1.msra.mxu0 0.0
      %990 = vmatprep.subr.mxu0 0.0
      %991 = vmatpush1.msra.mxu0 0.0
      %992 = vmatprep.subr.mxu0 0.0
      %993 = vmatpush1.msra.mxu0 0.0
      %994 = vmatprep.subr.mxu0 0.0
      %995 = vmatpush1.msra.mxu0 0.0
      %996 = vmatprep.subr.mxu0 0.0
      %997 = vmatpush1.msra.mxu0 0.0
      %998 = vmatprep.subr.mxu0 0.0
      %999 = vmatpush1.msra.mxu0 0.0
      %1000 = vmatprep.subr.mxu0 0.0
      %1001 = vmatpush1.msra.mxu0 0.0
      %1002 = vmatprep.subr.mxu0 0.0
      %1003 = vmatpush1.msra.mxu0 0.0
      %1004 = vmatprep.subr.mxu0 0.0
      %1005 = vmatpush1.msra.mxu0 0.0
      %1006 = vmatprep.subr.mxu0 0.0
      %1007 = vmatpush1.msra.mxu0 0.0
      %1008 = vmatprep.subr.mxu0 0.0
      %1009 = vmatpush1.msra.mxu0 0.0
      %1010 = vmatprep.subr.mxu0 0.0
      %1011 = vmatpush1.msra.mxu0 0.0
      %1012 = vmatprep.subr.mxu0 0.0
      %1013 = vmatpush1.msra.mxu0 0.0
      %1014 = vmatprep.subr.mxu0 0.0
      %1015 = vmatpush1.msra.mxu0 0.0
      %1016 = vmatprep.subr.mxu0 0.0
      %1017 = vmatpush1.msra.mxu0 0.0
      %1018 = vmatprep.subr.mxu0 0.0
      %1019 = vmatpush1.msra.mxu0 0.0
      %1020 = vmatprep.subr.mxu0 0.0
      %1021 = vmatpush1.msra.mxu0 0.0
      %1022 = vmatprep.subr.mxu0 0.0
      %1023 = vmatpush1.msra.mxu0 0.0
      %1024 = vmatprep.subr.mxu0 0.0
      %1025 = vmatpush1.msra.mxu0 0.0
      %1026 = vmatprep.mubr.f32.mxu0 0.0
      %1027 = vmatmul.mubr.f32.gmra.mrb[0].mxu0 %v958
      %v1028 = vpop.f32.mrb[0].mxu0
      %v1029 = vadd.f32 0.0, %v1028
      %v1030 = vpop.f32.mrb[0].mxu0
      %1031 = vdwg.mxu0
      %v1032 = vadd.f32 %v947, %v1029
      %s1033 = scalar_lea.vmem %s4, 14
      %v1034 = vld [vmem:[%s1033] sm:$0x3]
      %1035 = vrot.lane.b32.xlu0 %v442, 111
      %v1036 = vpop.permute.xlu0 %1035
      %v1038 = vsel %vm454, %v1034, 0
      %v1040 = vsel %vm458, %v1036, 0
      %1042 = vmatprep.subr.mxu0 0.0
      %1043 = vmatpush1.msra.mxu0 %v1040
      %1044 = vmatprep.subr.mxu0 0.0
      %1045 = vmatpush1.msra.mxu0 0.0
      %1046 = vmatprep.subr.mxu0 0.0
      %1047 = vmatpush1.msra.mxu0 0.0
      %1048 = vmatprep.subr.mxu0 0.0
      %1049 = vmatpush1.msra.mxu0 0.0
      %1050 = vmatprep.subr.mxu0 0.0
      %1051 = vmatpush1.msra.mxu0 0.0
      %1052 = vmatprep.subr.mxu0 0.0
      %1053 = vmatpush1.msra.mxu0 0.0
      %1054 = vmatprep.subr.mxu0 0.0
      %1055 = vmatpush1.msra.mxu0 0.0
      %1056 = vmatprep.subr.mxu0 0.0
      %1057 = vmatpush1.msra.mxu0 0.0
      %1058 = vmatprep.subr.mxu0 0.0
      %1059 = vmatpush1.msra.mxu0 0.0
      %1060 = vmatprep.subr.mxu0 0.0
      %1061 = vmatpush1.msra.mxu0 0.0
      %1062 = vmatprep.subr.mxu0 0.0
      %1063 = vmatpush1.msra.mxu0 0.0
      %1064 = vmatprep.subr.mxu0 0.0
      %1065 = vmatpush1.msra.mxu0 0.0
      %1066 = vmatprep.subr.mxu0 0.0
      %1067 = vmatpush1.msra.mxu0 0.0
      %1068 = vmatprep.subr.mxu0 0.0
      %1069 = vmatpush1.msra.mxu0 0.0
      %1070 = vmatprep.subr.mxu0 0.0
      %1071 = vmatpush1.msra.mxu0 0.0
      %1072 = vmatprep.subr.mxu0 0.0
      %1073 = vmatpush1.msra.mxu0 0.0
      %1074 = vmatprep.subr.mxu0 0.0
      %1075 = vmatpush1.msra.mxu0 0.0
      %1076 = vmatprep.subr.mxu0 0.0
      %1077 = vmatpush1.msra.mxu0 0.0
      %1078 = vmatprep.subr.mxu0 0.0
      %1079 = vmatpush1.msra.mxu0 0.0
      %1080 = vmatprep.subr.mxu0 0.0
      %1081 = vmatpush1.msra.mxu0 0.0
      %1082 = vmatprep.subr.mxu0 0.0
      %1083 = vmatpush1.msra.mxu0 0.0
      %1084 = vmatprep.subr.mxu0 0.0
      %1085 = vmatpush1.msra.mxu0 0.0
      %1086 = vmatprep.subr.mxu0 0.0
      %1087 = vmatpush1.msra.mxu0 0.0
      %1088 = vmatprep.subr.mxu0 0.0
      %1089 = vmatpush1.msra.mxu0 0.0
      %1090 = vmatprep.subr.mxu0 0.0
      %1091 = vmatpush1.msra.mxu0 0.0
      %1092 = vmatprep.subr.mxu0 0.0
      %1093 = vmatpush1.msra.mxu0 0.0
      %1094 = vmatprep.subr.mxu0 0.0
      %1095 = vmatpush1.msra.mxu0 0.0
      %1096 = vmatprep.subr.mxu0 0.0
      %1097 = vmatpush1.msra.mxu0 0.0
      %1098 = vmatprep.subr.mxu0 0.0
      %1099 = vmatpush1.msra.mxu0 0.0
      %1100 = vmatprep.subr.mxu0 0.0
      %1101 = vmatpush1.msra.mxu0 0.0
      %1102 = vmatprep.subr.mxu0 0.0
      %1103 = vmatpush1.msra.mxu0 0.0
      %1104 = vmatprep.subr.mxu0 0.0
      %1105 = vmatpush1.msra.mxu0 0.0
      %1106 = vmatprep.mubr.f32.mxu0 0.0
      %1107 = vmatmul.mubr.f32.gmra.mrb[0].mxu0 %v1038
      %v1108 = vpop.f32.mrb[0].mxu0
      %v1109 = vadd.f32 0.0, %v1108
      %v1110 = vpop.f32.mrb[0].mxu0
      %1111 = vdwg.mxu0
      %v1112 = vadd.f32 %v1032, %v1109
      %1113 = vrot.lane.b32.xlu0 %v610, 18
      %v1114 = vpop.permute.xlu0 %1113
      %v1116 = vmul.f32 %v442, %v1114
      %s1117 = scalar_lea.vmem %s4, 16
      %v1118 = vld [vmem:[%s1117] sm:$0x3]
      %1120 = vrot.lane.b32.xlu0 %v1116, 110
      %v1121 = vpop.permute.xlu0 %1120
      %v1123 = vsel %vm454, %v1118, 0
      %v1125 = vsel %vm458, %v1121, 0
      %1127 = vmatprep.subr.mxu0 0.0
      %1128 = vmatpush1.msra.mxu0 %v1125
      %1129 = vmatprep.subr.mxu0 0.0
      %1130 = vmatpush1.msra.mxu0 0.0
      %1131 = vmatprep.subr.mxu0 0.0
      %1132 = vmatpush1.msra.mxu0 0.0
      %1133 = vmatprep.subr.mxu0 0.0
      %1134 = vmatpush1.msra.mxu0 0.0
      %1135 = vmatprep.subr.mxu0 0.0
      %1136 = vmatpush1.msra.mxu0 0.0
      %1137 = vmatprep.subr.mxu0 0.0
      %1138 = vmatpush1.msra.mxu0 0.0
      %1139 = vmatprep.subr.mxu0 0.0
      %1140 = vmatpush1.msra.mxu0 0.0
      %1141 = vmatprep.subr.mxu0 0.0
      %1142 = vmatpush1.msra.mxu0 0.0
      %1143 = vmatprep.subr.mxu0 0.0
      %1144 = vmatpush1.msra.mxu0 0.0
      %1145 = vmatprep.subr.mxu0 0.0
      %1146 = vmatpush1.msra.mxu0 0.0
      %1147 = vmatprep.subr.mxu0 0.0
      %1148 = vmatpush1.msra.mxu0 0.0
      %1149 = vmatprep.subr.mxu0 0.0
      %1150 = vmatpush1.msra.mxu0 0.0
      %1151 = vmatprep.subr.mxu0 0.0
      %1152 = vmatpush1.msra.mxu0 0.0
      %1153 = vmatprep.subr.mxu0 0.0
      %1154 = vmatpush1.msra.mxu0 0.0
      %1155 = vmatprep.subr.mxu0 0.0
      %1156 = vmatpush1.msra.mxu0 0.0
      %1157 = vmatprep.subr.mxu0 0.0
      %1158 = vmatpush1.msra.mxu0 0.0
      %1159 = vmatprep.subr.mxu0 0.0
      %1160 = vmatpush1.msra.mxu0 0.0
      %1161 = vmatprep.subr.mxu0 0.0
      %1162 = vmatpush1.msra.mxu0 0.0
      %1163 = vmatprep.subr.mxu0 0.0
      %1164 = vmatpush1.msra.mxu0 0.0
      %1165 = vmatprep.subr.mxu0 0.0
      %1166 = vmatpush1.msra.mxu0 0.0
      %1167 = vmatprep.subr.mxu0 0.0
      %1168 = vmatpush1.msra.mxu0 0.0
      %1169 = vmatprep.subr.mxu0 0.0
      %1170 = vmatpush1.msra.mxu0 0.0
      %1171 = vmatprep.subr.mxu0 0.0
      %1172 = vmatpush1.msra.mxu0 0.0
      %1173 = vmatprep.subr.mxu0 0.0
      %1174 = vmatpush1.msra.mxu0 0.0
      %1175 = vmatprep.subr.mxu0 0.0
      %1176 = vmatpush1.msra.mxu0 0.0
      %1177 = vmatprep.subr.mxu0 0.0
      %1178 = vmatpush1.msra.mxu0 0.0
      %1179 = vmatprep.subr.mxu0 0.0
      %1180 = vmatpush1.msra.mxu0 0.0
      %1181 = vmatprep.subr.mxu0 0.0
      %1182 = vmatpush1.msra.mxu0 0.0
      %1183 = vmatprep.subr.mxu0 0.0
      %1184 = vmatpush1.msra.mxu0 0.0
      %1185 = vmatprep.subr.mxu0 0.0
      %1186 = vmatpush1.msra.mxu0 0.0
      %1187 = vmatprep.subr.mxu0 0.0
      %1188 = vmatpush1.msra.mxu0 0.0
      %1189 = vmatprep.subr.mxu0 0.0
      %1190 = vmatpush1.msra.mxu0 0.0
      %1191 = vmatprep.mubr.f32.mxu0 0.0
      %1192 = vmatmul.mubr.f32.gmra.mrb[0].mxu0 %v1123
      %v1193 = vpop.f32.mrb[0].mxu0
      %v1194 = vadd.f32 0.0, %v1193
      %v1195 = vpop.f32.mrb[0].mxu0
      %1196 = vdwg.mxu0
      %v1197 = vadd.f32 %v1112, %v1194
      %v1198 = vld [vmem:[%s5] sm:$0x3]
      %1200 = vset.pattern.permute.xlu0 0
      %1201 = vperm.xlu0 %1200, %v1198
      %v1202 = vpop.permute.xlu0 %1201
      %v1204 = vadd.f32 %v1197, %v1202
      %v1205 = vmax.f32 %v1204, 0.0
      %v1206 = vld [vmem:[%s6] sm:$0xff]
      %v1207 = vld [vmem:[%s6 + $0x8] sm:$0xff]
      %v1208 = vld [vmem:[%s7] sm:$0xff]
      %v1209 = vld [vmem:[%s7 + $0x8] sm:$0xff]
      %1211 = vset.pattern.permute.xlu0 0
      %1212 = vperm.xlu0 %1211, %v1208
      %v1213 = vpop.permute.xlu0 %1212
      %1216 = vset.pattern.permute.xlu0 0
      %1217 = vperm.xlu0 %1216, %v1209
      %v1218 = vpop.permute.xlu0 %1217
      %v1221 = vsel %vm454, %v1206, 0
      %v1224 = vsel %vm454, %v1207, 0
      %v1227 = vsel %vm458, %v1205, 0
      %1229 = vmatprep.subr.mxu0 0.0
      %1230 = vmatpush1.msra.mxu0 %v1227
      %1231 = vmatprep.subr.mxu0 0.0
      %1232 = vmatpush1.msra.mxu0 0.0
      %1233 = vmatprep.subr.mxu0 0.0
      %1234 = vmatpush1.msra.mxu0 0.0
      %1235 = vmatprep.subr.mxu0 0.0
      %1236 = vmatpush1.msra.mxu0 0.0
      %1237 = vmatprep.subr.mxu0 0.0
      %1238 = vmatpush1.msra.mxu0 0.0
      %1239 = vmatprep.subr.mxu0 0.0
      %1240 = vmatpush1.msra.mxu0 0.0
      %1241 = vmatprep.subr.mxu0 0.0
      %1242 = vmatpush1.msra.mxu0 0.0
      %1243 = vmatprep.subr.mxu0 0.0
      %1244 = vmatpush1.msra.mxu0 0.0
      %1245 = vmatprep.subr.mxu0 0.0
      %1246 = vmatpush1.msra.mxu0 0.0
      %1247 = vmatprep.subr.mxu0 0.0
      %1248 = vmatpush1.msra.mxu0 0.0
      %1249 = vmatprep.subr.mxu0 0.0
      %1250 = vmatpush1.msra.mxu0 0.0
      %1251 = vmatprep.subr.mxu0 0.0
      %1252 = vmatpush1.msra.mxu0 0.0
      %1253 = vmatprep.subr.mxu0 0.0
      %1254 = vmatpush1.msra.mxu0 0.0
      %1255 = vmatprep.subr.mxu0 0.0
      %1256 = vmatpush1.msra.mxu0 0.0
      %1257 = vmatprep.subr.mxu0 0.0
      %1258 = vmatpush1.msra.mxu0 0.0
      %1259 = vmatprep.subr.mxu0 0.0
      %1260 = vmatpush1.msra.mxu0 0.0
      %1261 = vmatprep.subr.mxu0 0.0
      %1262 = vmatpush1.msra.mxu0 0.0
      %1263 = vmatprep.subr.mxu0 0.0
      %1264 = vmatpush1.msra.mxu0 0.0
      %1265 = vmatprep.subr.mxu0 0.0
      %1266 = vmatpush1.msra.mxu0 0.0
      %1267 = vmatprep.subr.mxu0 0.0
      %1268 = vmatpush1.msra.mxu0 0.0
      %1269 = vmatprep.subr.mxu0 0.0
      %1270 = vmatpush1.msra.mxu0 0.0
      %1271 = vmatprep.subr.mxu0 0.0
      %1272 = vmatpush1.msra.mxu0 0.0
      %1273 = vmatprep.subr.mxu0 0.0
      %1274 = vmatpush1.msra.mxu0 0.0
      %1275 = vmatprep.subr.mxu0 0.0
      %1276 = vmatpush1.msra.mxu0 0.0
      %1277 = vmatprep.subr.mxu0 0.0
      %1278 = vmatpush1.msra.mxu0 0.0
      %1279 = vmatprep.subr.mxu0 0.0
      %1280 = vmatpush1.msra.mxu0 0.0
      %1281 = vmatprep.subr.mxu0 0.0
      %1282 = vmatpush1.msra.mxu0 0.0
      %1283 = vmatprep.subr.mxu0 0.0
      %1284 = vmatpush1.msra.mxu0 0.0
      %1285 = vmatprep.subr.mxu0 0.0
      %1286 = vmatpush1.msra.mxu0 0.0
      %1287 = vmatprep.subr.mxu0 0.0
      %1288 = vmatpush1.msra.mxu0 0.0
      %1289 = vmatprep.subr.mxu0 0.0
      %1290 = vmatpush1.msra.mxu0 0.0
      %1291 = vmatprep.subr.mxu0 0.0
      %1292 = vmatpush1.msra.mxu0 0.0
      %1293 = vmatprep.mubr.f32.mxu0 0.0
      %1294 = vmatmul.mubr.f32.gmra.mrb[0].mxu0 %v1221
      %v1295 = vpop.f32.mrb[0].mxu0
      %v1296 = vadd.f32 %v1213, %v1295
      %v1297 = vpop.f32.mrb[0].mxu0
      %1298 = vmatprep.mubr.f32.mxu0 0.0
      %1299 = vmatmul.mubr.f32.gmra.mrb[0].mxu0 %v1224
      %v1300 = vpop.f32.mrb[0].mxu0
      %v1301 = vadd.f32 %v1218, %v1300
      %v1302 = vpop.f32.mrb[0].mxu0
      %1303 = vdwg.mxu0
      %v1304 = vmax.f32 %v1296, 0.0
      %v1305 = vmax.f32 %v1301, 0.0
      %v1306 = vmax.f32 %v344, %v345
      %v1307 = vmax.f32 %v346, %v347
      %v1308 = vmax.f32 %v1306, %v1307
      %vm1309 = vcmp.eq.f32.partialorder %v344, %v1308
      %vm1310 = vcmp.eq.f32.partialorder %v345, %v1308
      %vm1311 = vcmp.eq.f32.partialorder %v346, %v1308
      %v1312 = vsel %vm1311, 16.0, 17.0
      %v1313 = vsel %vm1310, 1.0, %v1312
      %v1314 = vsel %vm1309, 0.0, %v1313
      %v1315 = vld [vmem:[%s1] sm:$0x1]
      %v1316 = vlaneseq
      %v1317 = vshrl.u32 %v1316, 7
      %v1318 = vsub.s32 0, %v1317
      %v1319 = vrot.slane %v1315, %v1318
      %v1320 = vadd.f32 %v1319, %v1314
      %v1321 = vcvt.f32.s32.to.zero.pseudo %v1320
      %vm1322 = vcmask 523264
      %1323 = vst.msk [vmem:[%s343] sm:$0xff] %vm1322, %v1321
      %v1324 = vadd.f32 %v1304, %v1308
      %v1325 = vmax.f32 %v1324, 0.0
      %1326 = vst.msk [vmem:[%s339] sm:$0xff] %vm1322, %v1325
      %v1327 = vmax.f32 %v1305, 0.0
      %1328 = vst.msk [vmem:[%s339 + $0x8] sm:$0xff] %vm1322, %v1327
      %p1329 = scmp.lt.s32.totalorder %s21, 1
      %s1330 = scalar_select %p1329, %s21, 1
      %s1331 = smul.addr %s1330, 2
      %s1332 = smul.addr %s1331, 8
      %s1333 = scalar_lea.vmem %s8, %s1332
      %p1334 = scmp.lt.s32.totalorder %s21, 1
      %s1335 = scalar_select %p1334, %s21, 1
      %s1336 = smul.addr %s1335, 8
      %s1337 = scalar_lea.vmem %s9, %s1336
      // Predicated region
      $region53: #{downsampling_bottleneck.1} parent=51 // pred_check
        %p1338 = pneg %p212
      $region54: #{downsampling_bottleneck.1} parent=51 // pred_check_branch
        %1340 = sbr.rel (%p1338) target = $region56
      $region55: #{downsampling_bottleneck.1} parent=51 // pred_region
        _
      $region56: #{downsampling_bottleneck.1} parent=51 // pred_fallthru
        _
      // Predicated region
      $region57: #{downsampling_bottleneck.1} parent=51 // pred_check
        %p1341 = pneg %p238
      $region58: #{downsampling_bottleneck.1} parent=51 // pred_check_branch
        %1343 = sbr.rel (%p1341) target = $region60
      $region59: #{downsampling_bottleneck.1} parent=51 // pred_region
        _
      $region60: #{downsampling_bottleneck.1} parent=51 // pred_fallthru
        _
    $region52: #{downsampling_bottleneck.1} parent=5 // pred_fallthru
      _
    %p1344 = scmp.le.s32.totalorder 2, %s16
    // Predicated region
    $region61: #{downsampling_bottleneck.1} parent=5 // pred_check
      %p1345 = pneg %p1344
    $region62: #{downsampling_bottleneck.1} parent=5 // pred_check_branch
      %1347 = sbr.rel (%p1345) target = $region64
    $region63: #{downsampling_bottleneck.1} parent=5 // pred_region
      %s1348 = ssub.s32 %s16, 2
      // Predicated region
      $region65: #{downsampling_bottleneck.1} parent=63 // pred_check
        %p1349 = pneg %p218
      $region66: #{downsampling_bottleneck.1} parent=63 // pred_check_branch
        %1351 = sbr.rel (%p1349) target = $region68
      $region67: #{downsampling_bottleneck.1} parent=63 // pred_region
        %p1352 = scmp.lt.s32.totalorder %s22, 1
        %s1353 = scalar_select %p1352, %s22, 1
        %s1354 = smul.addr %s1353, 2
        %s1355 = smul.addr %s1354, 8
        %s1356 = scalar_lea.vmem %s8, %s1355
      $region68: #{downsampling_bottleneck.1} parent=63 // pred_fallthru
        _
      // Predicated region
      $region69: #{downsampling_bottleneck.1} parent=63 // pred_check
        %p1357 = pneg %p244
      $region70: #{downsampling_bottleneck.1} parent=63 // pred_check_branch
        %1359 = sbr.rel (%p1357) target = $region72
      $region71: #{downsampling_bottleneck.1} parent=63 // pred_region
        %p1360 = scmp.lt.s32.totalorder %s22, 1
        %s1361 = scalar_select %p1360, %s22, 1
        %s1362 = smul.addr %s1361, 8
        %s1363 = scalar_lea.vmem %s9, %s1362
      $region72: #{downsampling_bottleneck.1} parent=63 // pred_fallthru
        _
    $region64: #{downsampling_bottleneck.1} parent=5 // pred_fallthru
      _
  $region6: #{downsampling_bottleneck.1} parent=0 // loop_footer
    %s20 = sadd.s32 1, %s16
  $region7: #{downsampling_bottleneck.1} parent=0 // loop_footer_branch
    %15 = sbr.rel target = $region3
  $region8: #{downsampling_bottleneck.1} parent=0 // loop_exit
    _

</llo_original>
